<compile_context>
chip_gen: v5e
topology: v5e:2x2
jax: 0.10.0
libtpu: 0.0.40
codegen_flags: <defaults>
</compile_context>

<pallas_src>
import functools

import jax
import jax.numpy as jnp
from jax import lax
from jax.experimental import pallas as pl
from jax.experimental.pallas import tpu as pltpu


def _leaky_relu(x, negative_slope=0.01):
    return jnp.where(x >= 0, x, negative_slope * x)


def _pow(x, p):
    """weight ** p; small integer powers become repeated VPU multiplies."""
    p = float(p)
    if p == 0.0:
        return jnp.ones_like(x)
    if p == int(p) and 0 < int(p) <= 4:
        r = x
        for _ in range(int(p) - 1):
            r = r * x
        return r
    return x ** jnp.float32(p)


def message_layer_kernel(
    xw_ref,      # (N, F+1) f32  -- node features with fractional weight appended
    sidx_ref,    # (M, 1)   i32
    nidx_ref,    # (M, 1)   i32
    gw1s_ref,    # (F, H*G)   gate Linear-1, "self" half, heads stacked on lanes
    gw1n_ref,    # (F, H*G)   gate Linear-1, "nbr"  half
    gb1_ref,     # (1, H*G)
    gw2bd_ref,   # (H*G, H)   gate Linear-2, block-diagonal over heads
    gb2_ref,     # (1, H)
    mw1s_ref,    # (F, H*Gm)  message Linear-1, "self" half
    mw1n_ref,    # (F, H*Gm)  message Linear-1, "nbr"  half
    mb1_ref,     # (1, H*Gm)
    mw2v_ref,    # (H*Gm, F)  message Linear-2, heads stacked vertically
    mb2_ref,     # (H, F)
    out_ref,     # (N, F)
    *, fea_len, num_heads, msg_hidden, weight_pow,
):
    F = fea_len
    H = num_heads
    Gm = msg_hidden

    xw = xw_ref[...]                          # (N, F+1)
    x = xw[:, :F]                             # (N, F)
    sidx = sidx_ref[...]                      # (M, 1)
    nidx = nidx_ref[...]                      # (M, 1)

    n_nodes = xw.shape[0]
    n_edges = sidx.shape[0]

    # ---- one-hot edge->node selection (built once, shared by all heads) ----
    node_iota = lax.broadcasted_iota(jnp.int32, (n_edges, n_nodes), 1)
    oh_self_b = sidx == node_iota                         # (M, N) bool
    oh_self = oh_self_b.astype(jnp.float32)               # (M, N)
    oh_nbr = (nidx == node_iota).astype(jnp.float32)      # (M, N)

    # ---- gathers as matmuls, once (weight column folded into nbr gather) ----
    self_full = jnp.dot(oh_self, xw, preferred_element_type=jnp.float32)  # (M, F+1)
    nbr_full = jnp.dot(oh_nbr, xw, preferred_element_type=jnp.float32)    # (M, F+1)
    self_fea = self_full[:, :F]                     # (M, F)
    nbr_fea = nbr_full[:, :F]                       # (M, F)
    nbr_w = nbr_full[:, F:F + 1]                    # (M, 1)
    w_pow = _pow(nbr_w, weight_pow)                 # (M, 1)

    # ---- gate MLP: all heads in one matmul (heads stacked along lanes) ----
    g_hidden = _leaky_relu(
        jnp.dot(self_fea, gw1s_ref[...], preferred_element_type=jnp.float32)
        + jnp.dot(nbr_fea, gw1n_ref[...], preferred_element_type=jnp.float32)
        + gb1_ref[...]
    )                                                                # (M, H*G)
    gate_logit = (
        jnp.dot(g_hidden, gw2bd_ref[...], preferred_element_type=jnp.float32)
        + gb2_ref[...]
    )                                                                # (M, H)

    # ---- message MLP hidden: all heads in one matmul ----
    m_hidden = _leaky_relu(
        jnp.dot(self_fea, mw1s_ref[...], preferred_element_type=jnp.float32)
        + jnp.dot(nbr_fea, mw1n_ref[...], preferred_element_type=jnp.float32)
        + mb1_ref[...]
    )                                                                # (M, H*Gm)

    # ---- weighted segment softmax per head: VPU/XLU only (no narrow MXU ops) ----
    mb2 = mb2_ref[...]                                   # (H, F)
    big_neg = jnp.float32(-1e30)
    gate_rep_parts = []
    bias_acc = jnp.zeros((n_edges, F), jnp.float32)
    for h in range(H):                                   # static, tiny
        logit_h = gate_logit[:, h:h + 1]                                  # (M, 1)
        masked = jnp.where(oh_self_b, logit_h, big_neg)                   # (M, N)
        node_max = jnp.max(masked, axis=0, keepdims=True)                 # (1, N)
        max_pe = jnp.sum(oh_self * node_max, axis=1, keepdims=True)       # (M, 1)
        e_h = w_pow * jnp.exp(logit_h - max_pe)                           # (M, 1)
        node_den = jnp.sum(jnp.where(oh_self_b, e_h, 0.0),
                           axis=0, keepdims=True)                         # (1, N)
        den_pe = jnp.sum(oh_self * node_den, axis=1, keepdims=True)       # (M, 1)
        gate_h = e_h / (den_pe + jnp.float32(1e-10))                      # (M, 1)
        gate_rep_parts.append(jnp.broadcast_to(gate_h, (n_edges, Gm)))
        bias_acc = bias_acc + gate_h * mb2[h:h + 1, :]                    # (M, F)
    gate_rep = jnp.concatenate(gate_rep_parts, axis=1)                    # (M, H*Gm)

    # ---- message Linear-2 with attention gate folded in, all heads summed ----
    # sum_h gate_h * (mh_h @ W2_h + b2_h) == (gate_rep * m_hidden) @ W2_stacked + bias_acc
    weighted = (
        jnp.dot(gate_rep * m_hidden, mw2v_ref[...],
                preferred_element_type=jnp.float32)
        + bias_acc
    )                                                                     # (M, F)

    # ---- scatter-add over self index, once for all heads ----
    head_sum = lax.dot_general(                                           # (N, F)
        oh_self, weighted,
        dimension_numbers=(((0,), (0,)), ((), ())),
        preferred_element_type=jnp.float32,
    )

    out_ref[...] = head_sum * jnp.float32(1.0 / H) + x


def message_layer_forward(elem_weights, elem_in_fea, self_fea_idx, nbr_fea_idx,
                          params, weight_pow):
    N, F = elem_in_fea.shape
    M = self_fea_idx.shape[0]
    H, twoF, G = params["gate_w1"].shape
    Gm = params["msg_w1"].shape[2]
    assert twoF == 2 * F

    f32 = jnp.float32
    xw = jnp.concatenate(
        [elem_in_fea.astype(f32), elem_weights.reshape(N, 1).astype(f32)], axis=1)
    sidx = self_fea_idx.reshape(M, 1).astype(jnp.int32)
    nidx = nbr_fea_idx.reshape(M, 1).astype(jnp.int32)

    # Stack heads along lanes / rows (head-major ordering everywhere).
    gw1 = params["gate_w1"]                                        # (H, 2F, G)
    gw1_self = jnp.transpose(gw1[:, :F, :], (1, 0, 2)).reshape(F, H * G)
    gw1_nbr = jnp.transpose(gw1[:, F:, :], (1, 0, 2)).reshape(F, H * G)
    gb1_row = params["gate_b1"].reshape(1, H * G)
    gw2_bd = jnp.zeros((H * G, H), f32)
    for h in range(H):
        gw2_bd = gw2_bd.at[h * G:(h + 1) * G, h].set(params["gate_w2"][h, :, 0])
    gb2_row = params["gate_b2"].reshape(1, H)

    mw1 = params["msg_w1"]                                         # (H, 2F, Gm)
    mw1_self = jnp.transpose(mw1[:, :F, :], (1, 0, 2)).reshape(F, H * Gm)
    mw1_nbr = jnp.transpose(mw1[:, F:, :], (1, 0, 2)).reshape(F, H * Gm)
    mb1_row = params["msg_b1"].reshape(1, H * Gm)
    mw2_vert = params["msg_w2"].reshape(H * Gm, F)
    mb2_mat = params["msg_b2"].reshape(H, F)

    kernel = functools.partial(
        message_layer_kernel,
        fea_len=F, num_heads=H, msg_hidden=Gm, weight_pow=float(weight_pow))

    out = pl.pallas_call(
        kernel,
        out_shape=jax.ShapeDtypeStruct((N, F), jnp.float32),
        compiler_params=pltpu.CompilerParams(vmem_limit_bytes=32 * 1024 * 1024),
    )(xw, sidx, nidx,
      gw1_self, gw1_nbr, gb1_row, gw2_bd, gb2_row,
      mw1_self, mw1_nbr, mb1_row, mw2_vert, mb2_mat)
    return out


def message_layer_ref(elem_weights, elem_in_fea, self_idx, nbr_idx, params, weight_pow):
    """Pure-JAX reference matching the PyTorch forward."""
    N, _ = elem_in_fea.shape
    H = params["gate_w1"].shape[0]
    w = elem_weights.reshape(-1, 1)
    nbr_w = w[nbr_idx]
    nbr_fea = elem_in_fea[nbr_idx]
    self_fea = elem_in_fea[self_idx]
    fea = jnp.concatenate([self_fea, nbr_fea], axis=1)

    def leaky(v):
        return jnp.where(v >= 0, v, 0.01 * v)

    head_outs = []
    for h in range(H):
        gh = leaky(fea @ params["gate_w1"][h] + params["gate_b1"][h])
        gate = gh @ params["gate_w2"][h] + params["gate_b2"][h]
        seg_max = jax.ops.segment_max(gate, self_idx, num_segments=N)
        gate = gate - seg_max[self_idx]
        gate = (nbr_w ** weight_pow) * jnp.exp(gate)
        denom = jax.ops.segment_sum(gate, self_idx, num_segments=N)
        gate = gate / (denom[self_idx] + 1e-10)
        mh = leaky(fea @ params["msg_w1"][h] + params["msg_b1"][h])
        msg = mh @ params["msg_w2"][h] + params["msg_b2"][h]
        head_outs.append(jax.ops.segment_sum(gate * msg, self_idx, num_segments=N))
    return jnp.mean(jnp.stack(head_outs), axis=0) + elem_in_fea


if __name__ == "__main__":
    # Model hyper-parameters (MessageLayer __init__)
    elem_fea_len = 16
    elem_heads = 3
    gate_hidden = 32   # elem_gate = [32]
    msg_hidden = 32    # elem_msg  = [32]
    weight_pow = 2.0

    # 2 crystals x 4 elements each, fully connected pairs within each crystal.
    n_per, n_crystals = 4, 2
    N = n_per * n_crystals
    self_list, nbr_list = [], []
    for c in range(n_crystals):
        base = c * n_per
        for i in range(n_per):
            for j in range(n_per):
                self_list.append(base + i)
                nbr_list.append(base + j)
    self_fea_idx = jnp.array(self_list, dtype=jnp.int32)   # (M,)
    nbr_fea_idx = jnp.array(nbr_list, dtype=jnp.int32)     # (M,)

    key = jax.random.PRNGKey(0)
    keys = jax.random.split(key, 10)

    raw_w = jax.random.uniform(keys[0], (n_crystals, n_per)) + 0.1
    elem_weights = (raw_w / raw_w.sum(axis=1, keepdims=True)).reshape(N, 1).astype(jnp.float32)
    elem_in_fea = jax.random.normal(keys[1], (N, elem_fea_len), dtype=jnp.float32)

    def init(k, fan_in, shape):
        return (jax.random.normal(k, shape, dtype=jnp.float32) / jnp.sqrt(jnp.float32(fan_in)))

    params = {
        "gate_w1": init(keys[2], 2 * elem_fea_len, (elem_heads, 2 * elem_fea_len, gate_hidden)),
        "gate_b1": init(keys[3], 2 * elem_fea_len, (elem_heads, 1, gate_hidden)),
        "gate_w2": init(keys[4], gate_hidden, (elem_heads, gate_hidden, 1)),
        "gate_b2": init(keys[5], gate_hidden, (elem_heads, 1, 1)),
        "msg_w1": init(keys[6], 2 * elem_fea_len, (elem_heads, 2 * elem_fea_len, msg_hidden)),
        "msg_b1": init(keys[7], 2 * elem_fea_len, (elem_heads, 1, msg_hidden)),
        "msg_w2": init(keys[8], msg_hidden, (elem_heads, msg_hidden, elem_fea_len)),
        "msg_b2": init(keys[9], msg_hidden, (elem_heads, 1, elem_fea_len)),
    }

    out = message_layer_forward(elem_weights, elem_in_fea, self_fea_idx, nbr_fea_idx,
                                params, weight_pow)
    out = jax.block_until_ready(out)

    ref = message_layer_ref(elem_weights, elem_in_fea, self_fea_idx, nbr_fea_idx,
                            params, weight_pow)
    assert out.shape == (N, elem_fea_len)
    assert jnp.allclose(out, ref, atol=3e-3, rtol=3e-3), jnp.max(jnp.abs(out - ref))
    print("KERNEL_OK")
</pallas_src>

<mosaic_0001>
module attributes {stable_mosaic.version = 11 : i64} {
  func.func @message_layer_kernel(%arg0: memref<8x17xf32, #tpu.memory_space<vmem>>, %arg1: memref<32x1xi32, #tpu.memory_space<vmem>>, %arg2: memref<32x1xi32, #tpu.memory_space<vmem>>, %arg3: memref<16x96xf32, #tpu.memory_space<vmem>>, %arg4: memref<16x96xf32, #tpu.memory_space<vmem>>, %arg5: memref<1x96xf32, #tpu.memory_space<vmem>>, %arg6: memref<96x3xf32, #tpu.memory_space<vmem>>, %arg7: memref<1x3xf32, #tpu.memory_space<vmem>>, %arg8: memref<16x96xf32, #tpu.memory_space<vmem>>, %arg9: memref<16x96xf32, #tpu.memory_space<vmem>>, %arg10: memref<1x96xf32, #tpu.memory_space<vmem>>, %arg11: memref<96x16xf32, #tpu.memory_space<vmem>>, %arg12: memref<3x16xf32, #tpu.memory_space<vmem>>, %arg13: memref<8x16xf32, #tpu.memory_space<vmem>>) attributes {dimension_semantics = [], scalar_prefetch = 0 : i64, scratch_operands = 0 : i64, tpu.core_type = #tpu.core_type<tc>} {
    %c0 = arith.constant 0 : index
    %c0_0 = arith.constant 0 : index
    %0 = vector.load %arg0[%c0, %c0_0] : memref<8x17xf32, #tpu.memory_space<vmem>>, vector<8x17xf32>
    %1 = vector.extract_strided_slice %0 {offsets = [0, 0], sizes = [8, 16], strides = [1, 1]} : vector<8x17xf32> to vector<8x16xf32>
    %c0_1 = arith.constant 0 : index
    %c0_2 = arith.constant 0 : index
    %2 = vector.load %arg1[%c0_1, %c0_2] : memref<32x1xi32, #tpu.memory_space<vmem>>, vector<32x1xi32>
    %c0_3 = arith.constant 0 : index
    %c0_4 = arith.constant 0 : index
    %3 = vector.load %arg2[%c0_3, %c0_4] : memref<32x1xi32, #tpu.memory_space<vmem>>, vector<32x1xi32>
    %4 = tpu.iota {dimensions = array<i32: 1>} : vector<32x8xi32>
    %5 = vector.broadcast %2 : vector<32x1xi32> to vector<32x8xi32>
    %6 = arith.cmpi eq, %5, %4 : vector<32x8xi32>
    %7 = arith.extui %6 : vector<32x8xi1> to vector<32x8xi32>
    %8 = arith.sitofp %7 : vector<32x8xi32> to vector<32x8xf32>
    %9 = vector.broadcast %3 : vector<32x1xi32> to vector<32x8xi32>
    %10 = arith.cmpi eq, %9, %4 : vector<32x8xi32>
    %11 = arith.extui %10 : vector<32x8xi1> to vector<32x8xi32>
    %12 = arith.sitofp %11 : vector<32x8xi32> to vector<32x8xf32>
    %cst = arith.constant dense<0.000000e+00> : vector<32x17xf32>
    %13 = tpu.matmul %8, %0, %cst {dimension_numbers = #tpu.dot_dimension_numbers<[1], [0], [0], [1], [0, 0, 1, 1], [], []>} : vector<32x8xf32>, vector<8x17xf32>, vector<32x17xf32> -> vector<32x17xf32>
    %cst_5 = arith.constant dense<0.000000e+00> : vector<32x17xf32>
    %14 = tpu.matmul %12, %0, %cst_5 {dimension_numbers = #tpu.dot_dimension_numbers<[1], [0], [0], [1], [0, 0, 1, 1], [], []>} : vector<32x8xf32>, vector<8x17xf32>, vector<32x17xf32> -> vector<32x17xf32>
    %15 = vector.extract_strided_slice %13 {offsets = [0, 0], sizes = [32, 16], strides = [1, 1]} : vector<32x17xf32> to vector<32x16xf32>
    %16 = vector.extract_strided_slice %14 {offsets = [0, 0], sizes = [32, 16], strides = [1, 1]} : vector<32x17xf32> to vector<32x16xf32>
    %17 = vector.extract_strided_slice %14 {offsets = [0, 16], sizes = [32, 1], strides = [1, 1]} : vector<32x17xf32> to vector<32x1xf32>
    %18 = arith.mulf %17, %17 : vector<32x1xf32>
    %c0_6 = arith.constant 0 : index
    %c0_7 = arith.constant 0 : index
    %19 = vector.load %arg3[%c0_6, %c0_7] : memref<16x96xf32, #tpu.memory_space<vmem>>, vector<16x96xf32>
    %cst_8 = arith.constant dense<0.000000e+00> : vector<32x96xf32>
    %20 = tpu.matmul %15, %19, %cst_8 {dimension_numbers = #tpu.dot_dimension_numbers<[1], [0], [0], [1], [0, 0, 1, 1], [], []>} : vector<32x16xf32>, vector<16x96xf32>, vector<32x96xf32> -> vector<32x96xf32>
    %c0_9 = arith.constant 0 : index
    %c0_10 = arith.constant 0 : index
    %21 = vector.load %arg4[%c0_9, %c0_10] : memref<16x96xf32, #tpu.memory_space<vmem>>, vector<16x96xf32>
    %cst_11 = arith.constant dense<0.000000e+00> : vector<32x96xf32>
    %22 = tpu.matmul %16, %21, %cst_11 {dimension_numbers = #tpu.dot_dimension_numbers<[1], [0], [0], [1], [0, 0, 1, 1], [], []>} : vector<32x16xf32>, vector<16x96xf32>, vector<32x96xf32> -> vector<32x96xf32>
    %23 = arith.addf %20, %22 : vector<32x96xf32>
    %c0_12 = arith.constant 0 : index
    %c0_13 = arith.constant 0 : index
    %24 = vector.load %arg5[%c0_12, %c0_13] : memref<1x96xf32, #tpu.memory_space<vmem>>, vector<1x96xf32>
    %25 = vector.broadcast %24 : vector<1x96xf32> to vector<32x96xf32>
    %26 = arith.addf %23, %25 : vector<32x96xf32>
    %cst_14 = arith.constant 0.000000e+00 : f32
    %27 = vector.broadcast %cst_14 : f32 to vector<32x96xf32>
    %28 = arith.cmpf oge, %26, %27 : vector<32x96xf32>
    %cst_15 = arith.constant 0.00999999977 : f32
    %29 = vector.broadcast %cst_15 : f32 to vector<32x96xf32>
    %30 = arith.mulf %29, %26 : vector<32x96xf32>
    %31 = arith.select %28, %26, %30 : vector<32x96xi1>, vector<32x96xf32>
    %c0_16 = arith.constant 0 : index
    %c0_17 = arith.constant 0 : index
    %32 = vector.load %arg6[%c0_16, %c0_17] : memref<96x3xf32, #tpu.memory_space<vmem>>, vector<96x3xf32>
    %cst_18 = arith.constant dense<0.000000e+00> : vector<32x3xf32>
    %33 = tpu.matmul %31, %32, %cst_18 {dimension_numbers = #tpu.dot_dimension_numbers<[1], [0], [0], [1], [0, 0, 1, 1], [], []>} : vector<32x96xf32>, vector<96x3xf32>, vector<32x3xf32> -> vector<32x3xf32>
    %c0_19 = arith.constant 0 : index
    %c0_20 = arith.constant 0 : index
    %34 = vector.load %arg7[%c0_19, %c0_20] : memref<1x3xf32, #tpu.memory_space<vmem>>, vector<1x3xf32>
    %35 = vector.broadcast %34 : vector<1x3xf32> to vector<32x3xf32>
    %36 = arith.addf %33, %35 : vector<32x3xf32>
    %c0_21 = arith.constant 0 : index
    %c0_22 = arith.constant 0 : index
    %37 = vector.load %arg8[%c0_21, %c0_22] : memref<16x96xf32, #tpu.memory_space<vmem>>, vector<16x96xf32>
    %cst_23 = arith.constant dense<0.000000e+00> : vector<32x96xf32>
    %38 = tpu.matmul %15, %37, %cst_23 {dimension_numbers = #tpu.dot_dimension_numbers<[1], [0], [0], [1], [0, 0, 1, 1], [], []>} : vector<32x16xf32>, vector<16x96xf32>, vector<32x96xf32> -> vector<32x96xf32>
    %c0_24 = arith.constant 0 : index
    %c0_25 = arith.constant 0 : index
    %39 = vector.load %arg9[%c0_24, %c0_25] : memref<16x96xf32, #tpu.memory_space<vmem>>, vector<16x96xf32>
    %cst_26 = arith.constant dense<0.000000e+00> : vector<32x96xf32>
    %40 = tpu.matmul %16, %39, %cst_26 {dimension_numbers = #tpu.dot_dimension_numbers<[1], [0], [0], [1], [0, 0, 1, 1], [], []>} : vector<32x16xf32>, vector<16x96xf32>, vector<32x96xf32> -> vector<32x96xf32>
    %41 = arith.addf %38, %40 : vector<32x96xf32>
    %c0_27 = arith.constant 0 : index
    %c0_28 = arith.constant 0 : index
    %42 = vector.load %arg10[%c0_27, %c0_28] : memref<1x96xf32, #tpu.memory_space<vmem>>, vector<1x96xf32>
    %43 = vector.broadcast %42 : vector<1x96xf32> to vector<32x96xf32>
    %44 = arith.addf %41, %43 : vector<32x96xf32>
    %cst_29 = arith.constant 0.000000e+00 : f32
    %45 = vector.broadcast %cst_29 : f32 to vector<32x96xf32>
    %46 = arith.cmpf oge, %44, %45 : vector<32x96xf32>
    %cst_30 = arith.constant 0.00999999977 : f32
    %47 = vector.broadcast %cst_30 : f32 to vector<32x96xf32>
    %48 = arith.mulf %47, %44 : vector<32x96xf32>
    %49 = arith.select %46, %44, %48 : vector<32x96xi1>, vector<32x96xf32>
    %c0_31 = arith.constant 0 : index
    %c0_32 = arith.constant 0 : index
    %50 = vector.load %arg12[%c0_31, %c0_32] : memref<3x16xf32, #tpu.memory_space<vmem>>, vector<3x16xf32>
    %cst_33 = arith.constant 0.000000e+00 : f32
    %51 = vector.broadcast %cst_33 : f32 to vector<32x16xf32>
    %52 = vector.extract_strided_slice %36 {offsets = [0, 0], sizes = [32, 1], strides = [1, 1]} : vector<32x3xf32> to vector<32x1xf32>
    %cst_34 = arith.constant -1.000000e+30 : f32
    %53 = vector.shape_cast %52 : vector<32x1xf32> to vector<32x1xf32>
    %54 = vector.broadcast %53 : vector<32x1xf32> to vector<32x8xf32>
    %55 = vector.broadcast %cst_34 : f32 to vector<32x8xf32>
    %56 = arith.select %6, %54, %55 : vector<32x8xi1>, vector<32x8xf32>
    %cst_35 = arith.constant dense<0xFF800000> : vector<8xf32>
    %57 = vector.multi_reduction <maximumf>, %56, %cst_35 [0] : vector<32x8xf32> to vector<8xf32>
    %58 = vector.shape_cast %57 : vector<8xf32> to vector<1x8xf32>
    %59 = vector.broadcast %58 : vector<1x8xf32> to vector<32x8xf32>
    %60 = arith.mulf %8, %59 : vector<32x8xf32>
    %cst_36 = arith.constant dense<0.000000e+00> : vector<32xf32>
    %61 = vector.multi_reduction <add>, %60, %cst_36 [1] : vector<32x8xf32> to vector<32xf32>
    %62 = vector.shape_cast %61 : vector<32xf32> to vector<32x1xf32>
    %63 = arith.subf %52, %62 : vector<32x1xf32>
    %64 = math.exp %63 : vector<32x1xf32>
    %65 = arith.mulf %18, %64 : vector<32x1xf32>
    %cst_37 = arith.constant 0.000000e+00 : f32
    %66 = vector.shape_cast %65 : vector<32x1xf32> to vector<32x1xf32>
    %67 = vector.broadcast %66 : vector<32x1xf32> to vector<32x8xf32>
    %68 = vector.broadcast %cst_37 : f32 to vector<32x8xf32>
    %69 = arith.select %6, %67, %68 : vector<32x8xi1>, vector<32x8xf32>
    %cst_38 = arith.constant dense<0.000000e+00> : vector<8xf32>
    %70 = vector.multi_reduction <add>, %69, %cst_38 [0] : vector<32x8xf32> to vector<8xf32>
    %71 = vector.shape_cast %70 : vector<8xf32> to vector<1x8xf32>
    %72 = vector.broadcast %71 : vector<1x8xf32> to vector<32x8xf32>
    %73 = arith.mulf %8, %72 : vector<32x8xf32>
    %cst_39 = arith.constant dense<0.000000e+00> : vector<32xf32>
    %74 = vector.multi_reduction <add>, %73, %cst_39 [1] : vector<32x8xf32> to vector<32xf32>
    %75 = vector.shape_cast %74 : vector<32xf32> to vector<32x1xf32>
    %cst_40 = arith.constant 1.000000e-10 : f32
    %76 = vector.broadcast %cst_40 : f32 to vector<32x1xf32>
    %77 = arith.addf %75, %76 : vector<32x1xf32>
    %78 = arith.divf %65, %77 : vector<32x1xf32>
    %79 = vector.shape_cast %78 : vector<32x1xf32> to vector<32x1xf32>
    %80 = vector.broadcast %79 : vector<32x1xf32> to vector<32x32xf32>
    %81 = vector.extract_strided_slice %50 {offsets = [0, 0], sizes = [1, 16], strides = [1, 1]} : vector<3x16xf32> to vector<1x16xf32>
    %82 = vector.broadcast %78 : vector<32x1xf32> to vector<32x16xf32>
    %83 = vector.broadcast %81 : vector<1x16xf32> to vector<32x16xf32>
    %84 = arith.mulf %82, %83 : vector<32x16xf32>
    %85 = arith.addf %51, %84 : vector<32x16xf32>
    %86 = vector.extract_strided_slice %36 {offsets = [0, 1], sizes = [32, 1], strides = [1, 1]} : vector<32x3xf32> to vector<32x1xf32>
    %cst_41 = arith.constant -1.000000e+30 : f32
    %87 = vector.shape_cast %86 : vector<32x1xf32> to vector<32x1xf32>
    %88 = vector.broadcast %87 : vector<32x1xf32> to vector<32x8xf32>
    %89 = vector.broadcast %cst_41 : f32 to vector<32x8xf32>
    %90 = arith.select %6, %88, %89 : vector<32x8xi1>, vector<32x8xf32>
    %cst_42 = arith.constant dense<0xFF800000> : vector<8xf32>
    %91 = vector.multi_reduction <maximumf>, %90, %cst_42 [0] : vector<32x8xf32> to vector<8xf32>
    %92 = vector.shape_cast %91 : vector<8xf32> to vector<1x8xf32>
    %93 = vector.broadcast %92 : vector<1x8xf32> to vector<32x8xf32>
    %94 = arith.mulf %8, %93 : vector<32x8xf32>
    %cst_43 = arith.constant dense<0.000000e+00> : vector<32xf32>
    %95 = vector.multi_reduction <add>, %94, %cst_43 [1] : vector<32x8xf32> to vector<32xf32>
    %96 = vector.shape_cast %95 : vector<32xf32> to vector<32x1xf32>
    %97 = arith.subf %86, %96 : vector<32x1xf32>
    %98 = math.exp %97 : vector<32x1xf32>
    %99 = arith.mulf %18, %98 : vector<32x1xf32>
    %cst_44 = arith.constant 0.000000e+00 : f32
    %100 = vector.shape_cast %99 : vector<32x1xf32> to vector<32x1xf32>
    %101 = vector.broadcast %100 : vector<32x1xf32> to vector<32x8xf32>
    %102 = vector.broadcast %cst_44 : f32 to vector<32x8xf32>
    %103 = arith.select %6, %101, %102 : vector<32x8xi1>, vector<32x8xf32>
    %cst_45 = arith.constant dense<0.000000e+00> : vector<8xf32>
    %104 = vector.multi_reduction <add>, %103, %cst_45 [0] : vector<32x8xf32> to vector<8xf32>
    %105 = vector.shape_cast %104 : vector<8xf32> to vector<1x8xf32>
    %106 = vector.broadcast %105 : vector<1x8xf32> to vector<32x8xf32>
    %107 = arith.mulf %8, %106 : vector<32x8xf32>
    %cst_46 = arith.constant dense<0.000000e+00> : vector<32xf32>
    %108 = vector.multi_reduction <add>, %107, %cst_46 [1] : vector<32x8xf32> to vector<32xf32>
    %109 = vector.shape_cast %108 : vector<32xf32> to vector<32x1xf32>
    %cst_47 = arith.constant 1.000000e-10 : f32
    %110 = vector.broadcast %cst_47 : f32 to vector<32x1xf32>
    %111 = arith.addf %109, %110 : vector<32x1xf32>
    %112 = arith.divf %99, %111 : vector<32x1xf32>
    %113 = vector.shape_cast %112 : vector<32x1xf32> to vector<32x1xf32>
    %114 = vector.broadcast %113 : vector<32x1xf32> to vector<32x32xf32>
    %115 = vector.extract_strided_slice %50 {offsets = [1, 0], sizes = [1, 16], strides = [1, 1]} : vector<3x16xf32> to vector<1x16xf32>
    %116 = vector.broadcast %112 : vector<32x1xf32> to vector<32x16xf32>
    %117 = vector.broadcast %115 : vector<1x16xf32> to vector<32x16xf32>
    %118 = arith.mulf %116, %117 : vector<32x16xf32>
    %119 = arith.addf %85, %118 : vector<32x16xf32>
    %120 = vector.extract_strided_slice %36 {offsets = [0, 2], sizes = [32, 1], strides = [1, 1]} : vector<32x3xf32> to vector<32x1xf32>
    %cst_48 = arith.constant -1.000000e+30 : f32
    %121 = vector.shape_cast %120 : vector<32x1xf32> to vector<32x1xf32>
    %122 = vector.broadcast %121 : vector<32x1xf32> to vector<32x8xf32>
    %123 = vector.broadcast %cst_48 : f32 to vector<32x8xf32>
    %124 = arith.select %6, %122, %123 : vector<32x8xi1>, vector<32x8xf32>
    %cst_49 = arith.constant dense<0xFF800000> : vector<8xf32>
    %125 = vector.multi_reduction <maximumf>, %124, %cst_49 [0] : vector<32x8xf32> to vector<8xf32>
    %126 = vector.shape_cast %125 : vector<8xf32> to vector<1x8xf32>
    %127 = vector.broadcast %126 : vector<1x8xf32> to vector<32x8xf32>
    %128 = arith.mulf %8, %127 : vector<32x8xf32>
    %cst_50 = arith.constant dense<0.000000e+00> : vector<32xf32>
    %129 = vector.multi_reduction <add>, %128, %cst_50 [1] : vector<32x8xf32> to vector<32xf32>
    %130 = vector.shape_cast %129 : vector<32xf32> to vector<32x1xf32>
    %131 = arith.subf %120, %130 : vector<32x1xf32>
    %132 = math.exp %131 : vector<32x1xf32>
    %133 = arith.mulf %18, %132 : vector<32x1xf32>
    %cst_51 = arith.constant 0.000000e+00 : f32
    %134 = vector.shape_cast %133 : vector<32x1xf32> to vector<32x1xf32>
    %135 = vector.broadcast %134 : vector<32x1xf32> to vector<32x8xf32>
    %136 = vector.broadcast %cst_51 : f32 to vector<32x8xf32>
    %137 = arith.select %6, %135, %136 : vector<32x8xi1>, vector<32x8xf32>
    %cst_52 = arith.constant dense<0.000000e+00> : vector<8xf32>
    %138 = vector.multi_reduction <add>, %137, %cst_52 [0] : vector<32x8xf32> to vector<8xf32>
    %139 = vector.shape_cast %138 : vector<8xf32> to vector<1x8xf32>
    %140 = vector.broadcast %139 : vector<1x8xf32> to vector<32x8xf32>
    %141 = arith.mulf %8, %140 : vector<32x8xf32>
    %cst_53 = arith.constant dense<0.000000e+00> : vector<32xf32>
    %142 = vector.multi_reduction <add>, %141, %cst_53 [1] : vector<32x8xf32> to vector<32xf32>
    %143 = vector.shape_cast %142 : vector<32xf32> to vector<32x1xf32>
    %cst_54 = arith.constant 1.000000e-10 : f32
    %144 = vector.broadcast %cst_54 : f32 to vector<32x1xf32>
    %145 = arith.addf %143, %144 : vector<32x1xf32>
    %146 = arith.divf %133, %145 : vector<32x1xf32>
    %147 = vector.shape_cast %146 : vector<32x1xf32> to vector<32x1xf32>
    %148 = vector.broadcast %147 : vector<32x1xf32> to vector<32x32xf32>
    %149 = vector.extract_strided_slice %50 {offsets = [2, 0], sizes = [1, 16], strides = [1, 1]} : vector<3x16xf32> to vector<1x16xf32>
    %150 = vector.broadcast %146 : vector<32x1xf32> to vector<32x16xf32>
    %151 = vector.broadcast %149 : vector<1x16xf32> to vector<32x16xf32>
    %152 = arith.mulf %150, %151 : vector<32x16xf32>
    %153 = arith.addf %119, %152 : vector<32x16xf32>
    %154 = tpu.concatenate %80, %114, %148 in 1 : vector<32x32xf32>, vector<32x32xf32>, vector<32x32xf32> -> vector<32x96xf32>
    %155 = arith.mulf %154, %49 : vector<32x96xf32>
    %c0_55 = arith.constant 0 : index
    %c0_56 = arith.constant 0 : index
    %156 = vector.load %arg11[%c0_55, %c0_56] : memref<96x16xf32, #tpu.memory_space<vmem>>, vector<96x16xf32>
    %cst_57 = arith.constant dense<0.000000e+00> : vector<32x16xf32>
    %157 = tpu.matmul %155, %156, %cst_57 {dimension_numbers = #tpu.dot_dimension_numbers<[1], [0], [0], [1], [0, 0, 1, 1], [], []>} : vector<32x96xf32>, vector<96x16xf32>, vector<32x16xf32> -> vector<32x16xf32>
    %158 = arith.addf %157, %153 : vector<32x16xf32>
    %cst_58 = arith.constant dense<0.000000e+00> : vector<8x16xf32>
    %159 = tpu.matmul %8, %158, %cst_58 {dimension_numbers = #tpu.dot_dimension_numbers<[0], [0], [1], [1], [0, 1, 1, 1], [], []>} : vector<32x8xf32>, vector<32x16xf32>, vector<8x16xf32> -> vector<8x16xf32>
    %cst_59 = arith.constant 0.333333343 : f32
    %160 = vector.broadcast %cst_59 : f32 to vector<8x16xf32>
    %161 = arith.mulf %159, %160 : vector<8x16xf32>
    %162 = arith.addf %161, %1 : vector<8x16xf32>
    %c0_60 = arith.constant 0 : index
    %c0_61 = arith.constant 0 : index
    %163 = vector.load %arg13[%c0_60, %c0_61] : memref<8x16xf32, #tpu.memory_space<vmem>>, vector<8x16xf32>
    tpu.vector_store %arg13[%c0_60, %c0_61], %162 {strides = array<i32>} : memref<8x16xf32, #tpu.memory_space<vmem>>, vector<8x16xf32>,
    return
  }
}

</mosaic_0001>

<llo_original>
// kernel: tpu_custom_call.1
$region0: #{tpu_custom_call.1}
  #allocation0 [shape = 'u32[]', space=smem, size = 0x4, offset = 0x4, fixed_abs, tag = 'smem constant byte address 0x4 - core index']
  #allocation1 [shape = 'u32[72,128]{1,0:T(1,128)}', space=vmem, size = 0x9000, scoped, tag = 'internal scratch']
  %s0 = inlined_call_operand.vmem [shape: f32[8,17], index: 0, kind: input, shape index: {}]
  %s1 = inlined_call_operand.vmem [shape: s32[32,1], index: 1, kind: input, shape index: {}]
  %s2 = inlined_call_operand.vmem [shape: s32[32,1], index: 2, kind: input, shape index: {}]
  %s3 = inlined_call_operand.vmem [shape: f32[16,96], index: 3, kind: input, shape index: {}]
  %s4 = inlined_call_operand.vmem [shape: f32[16,96], index: 4, kind: input, shape index: {}]
  %s5 = inlined_call_operand.vmem [shape: f32[1,96], index: 5, kind: input, shape index: {}]
  %s6 = inlined_call_operand.vmem [shape: f32[96,3], index: 6, kind: input, shape index: {}]
  %s7 = inlined_call_operand.vmem [shape: f32[1,3], index: 7, kind: input, shape index: {}]
  %s8 = inlined_call_operand.vmem [shape: f32[16,96], index: 8, kind: input, shape index: {}]
  %s9 = inlined_call_operand.vmem [shape: f32[16,96], index: 9, kind: input, shape index: {}]
  %s10 = inlined_call_operand.vmem [shape: f32[1,96], index: 10, kind: input, shape index: {}]
  %s11 = inlined_call_operand.vmem [shape: f32[96,16], index: 11, kind: input, shape index: {}]
  %s12 = inlined_call_operand.vmem [shape: f32[3,16], index: 12, kind: input, shape index: {}]
  %s13 = inlined_call_operand.hbm [shape: f32[8,16], index: 13, kind: output, shape index: {}]
  %s14 = sld [smem:[#allocation0]]
  $region62: #{tpu_custom_call.1} parent=0
    _
  %s16 = ssub.s32 1, %s14
  %s17 = scalar_select 0, %s16, %s14
  $region1: #{tpu_custom_call.1} parent=0
    #allocation2 [shape = 'u8[4096]{0}', space=vmem, size = 0x1000, scoped, tag = 'output window, operand 0, single buffered']
    #allocation3 [shape = 's32[1]{0}', space=sflag, size = 0x4, scoped, tag = 'scoped memory for tpu_custom_call.1']
    %18 = vsyncpa [#allocation3], 0
    // Predicated region
    $region2: #{tpu_custom_call.1} parent=1 // pred_check
      _
    $region3: #{tpu_custom_call.1} parent=1 // pred_check_branch
      %20 = sbr.rel (0) target = $region5
    $region4: #{tpu_custom_call.1} parent=1 // pred_region
      _
    $region5: #{tpu_custom_call.1} parent=1 // pred_fallthru
      _
    // Predicated region
    $region6: #{tpu_custom_call.1} parent=1 // pred_check
      _
    $region7: #{tpu_custom_call.1} parent=1 // pred_check_branch
      %22 = sbr.rel (0) target = $region9
    $region8: #{tpu_custom_call.1} parent=1 // pred_region
      _
    $region9: #{tpu_custom_call.1} parent=1 // pred_fallthru
      _
    // Predicated region
    $region10: #{tpu_custom_call.1} parent=1 // pred_check
      _
    $region11: #{tpu_custom_call.1} parent=1 // pred_check_branch
      %24 = sbr.rel (0) target = $region13
    $region12: #{tpu_custom_call.1} parent=1 // pred_region
      _
    $region13: #{tpu_custom_call.1} parent=1 // pred_fallthru
      _
    // Predicated region
    $region14: #{tpu_custom_call.1} parent=1 // pred_check
      _
    $region15: #{tpu_custom_call.1} parent=1 // pred_check_branch
      %26 = sbr.rel (0) target = $region17
    $region16: #{tpu_custom_call.1} parent=1 // pred_region
      _
    $region17: #{tpu_custom_call.1} parent=1 // pred_fallthru
      _
    // Predicated region
    $region18: #{tpu_custom_call.1} parent=1 // pred_check
      _
    $region19: #{tpu_custom_call.1} parent=1 // pred_check_branch
      %28 = sbr.rel (0) target = $region21
    $region20: #{tpu_custom_call.1} parent=1 // pred_region
      _
    $region21: #{tpu_custom_call.1} parent=1 // pred_fallthru
      _
    // Predicated region
    $region22: #{tpu_custom_call.1} parent=1 // pred_check
      _
    $region23: #{tpu_custom_call.1} parent=1 // pred_check_branch
      %30 = sbr.rel (0) target = $region25
    $region24: #{tpu_custom_call.1} parent=1 // pred_region
      _
    $region25: #{tpu_custom_call.1} parent=1 // pred_fallthru
      _
    // Predicated region
    $region26: #{tpu_custom_call.1} parent=1 // pred_check
      _
    $region27: #{tpu_custom_call.1} parent=1 // pred_check_branch
      %32 = sbr.rel (0) target = $region29
    $region28: #{tpu_custom_call.1} parent=1 // pred_region
      _
    $region29: #{tpu_custom_call.1} parent=1 // pred_fallthru
      _
    // Predicated region
    $region30: #{tpu_custom_call.1} parent=1 // pred_check
      _
    $region31: #{tpu_custom_call.1} parent=1 // pred_check_branch
      %34 = sbr.rel (0) target = $region33
    $region32: #{tpu_custom_call.1} parent=1 // pred_region
      _
    $region33: #{tpu_custom_call.1} parent=1 // pred_fallthru
      _
    // Predicated region
    $region34: #{tpu_custom_call.1} parent=1 // pred_check
      _
    $region35: #{tpu_custom_call.1} parent=1 // pred_check_branch
      %36 = sbr.rel (0) target = $region37
    $region36: #{tpu_custom_call.1} parent=1 // pred_region
      _
    $region37: #{tpu_custom_call.1} parent=1 // pred_fallthru
      _
    // Predicated region
    $region38: #{tpu_custom_call.1} parent=1 // pred_check
      _
    $region39: #{tpu_custom_call.1} parent=1 // pred_check_branch
      %38 = sbr.rel (0) target = $region41
    $region40: #{tpu_custom_call.1} parent=1 // pred_region
      _
    $region41: #{tpu_custom_call.1} parent=1 // pred_fallthru
      _
    // Predicated region
    $region42: #{tpu_custom_call.1} parent=1 // pred_check
      _
    $region43: #{tpu_custom_call.1} parent=1 // pred_check_branch
      %40 = sbr.rel (0) target = $region45
    $region44: #{tpu_custom_call.1} parent=1 // pred_region
      _
    $region45: #{tpu_custom_call.1} parent=1 // pred_fallthru
      _
    // Predicated region
    $region46: #{tpu_custom_call.1} parent=1 // pred_check
      _
    $region47: #{tpu_custom_call.1} parent=1 // pred_check_branch
      %42 = sbr.rel (0) target = $region49
    $region48: #{tpu_custom_call.1} parent=1 // pred_region
      _
    $region49: #{tpu_custom_call.1} parent=1 // pred_fallthru
      _
    // Predicated region
    $region50: #{tpu_custom_call.1} parent=1 // pred_check
      _
    $region51: #{tpu_custom_call.1} parent=1 // pred_check_branch
      %44 = sbr.rel (0) target = $region53
    $region52: #{tpu_custom_call.1} parent=1 // pred_region
      _
    $region53: #{tpu_custom_call.1} parent=1 // pred_fallthru
      _
    %v45 = vld [vmem:[%s0] sm:$0xff]
    %v46 = vld [vmem:[%s1] sm:$0xff]
    %v47 = vld [vmem:[%s1 + $0x8] sm:$0xff]
    %v48 = vld [vmem:[%s1 + $0x10] sm:$0xff]
    %v49 = vld [vmem:[%s1 + $0x18] sm:$0xff]
    %v50 = vld [vmem:[%s2] sm:$0xff]
    %v51 = vld [vmem:[%s2 + $0x8] sm:$0xff]
    %v52 = vld [vmem:[%s2 + $0x10] sm:$0xff]
    %v53 = vld [vmem:[%s2 + $0x18] sm:$0xff]
    %v54 = vlaneseq
    %v55 = vand.u32 %v54, 127
    %56 = vset.pattern.permute.xlu0 0
    %57 = vperm.xlu0 %56, %v46
    %v58 = vpop.permute.xlu0 %57
    %59 = vset.pattern.permute.xlu0 0
    %60 = vperm.xlu0 %59, %v47
    %v61 = vpop.permute.xlu0 %60
    %62 = vset.pattern.permute.xlu0 0
    %63 = vperm.xlu0 %62, %v48
    %v64 = vpop.permute.xlu0 %63
    %65 = vset.pattern.permute.xlu0 0
    %66 = vperm.xlu0 %65, %v49
    %v67 = vpop.permute.xlu0 %66
    %vm68 = vcmp.eq.s32.totalorder %v58, %v55
    %vm69 = vcmp.eq.s32.totalorder %v61, %v55
    %vm70 = vcmp.eq.s32.totalorder %v64, %v55
    %vm71 = vcmp.eq.s32.totalorder %v67, %v55
    %v72 = vsel %vm68, 1, 0
    %v73 = vsel %vm69, 1, 0
    %v74 = vsel %vm70, 1, 0
    %v75 = vsel %vm71, 1, 0
    %v76 = vcvt.s32.f32 %v72
    %v77 = vcvt.s32.f32 %v73
    %v78 = vcvt.s32.f32 %v74
    %v79 = vcvt.s32.f32 %v75
    %80 = vset.pattern.permute.xlu0 0
    %81 = vperm.xlu0 %80, %v50
    %v82 = vpop.permute.xlu0 %81
    %83 = vset.pattern.permute.xlu0 0
    %84 = vperm.xlu0 %83, %v51
    %v85 = vpop.permute.xlu0 %84
    %86 = vset.pattern.permute.xlu0 0
    %87 = vperm.xlu0 %86, %v52
    %v88 = vpop.permute.xlu0 %87
    %89 = vset.pattern.permute.xlu0 0
    %90 = vperm.xlu0 %89, %v53
    %v91 = vpop.permute.xlu0 %90
    %vm92 = vcmp.eq.s32.totalorder %v82, %v55
    %vm93 = vcmp.eq.s32.totalorder %v85, %v55
    %vm94 = vcmp.eq.s32.totalorder %v88, %v55
    %vm95 = vcmp.eq.s32.totalorder %v91, %v55
    %v96 = vsel %vm92, 1, 0
    %v97 = vsel %vm93, 1, 0
    %v98 = vsel %vm94, 1, 0
    %v99 = vsel %vm95, 1, 0
    %v100 = vcvt.s32.f32 %v96
    %v101 = vcvt.s32.f32 %v97
    %v102 = vcvt.s32.f32 %v98
    %v103 = vcvt.s32.f32 %v99
    %vm104 = vcmask 64512
    %v106 = vsel %vm104, %v76, 0
    %v109 = vsel %vm104, %v77, 0
    %v112 = vsel %vm104, %v78, 0
    %v115 = vsel %vm104, %v79, 0
    %117 = vmatpush.msra.mxu0 0.0
    %118 = vmatpush.msra.mxu0 0.0
    %119 = vmatpush.msra.mxu0 0.0
    %120 = vmatpush.msra.mxu0 0.0
    %121 = vmatpush.msra.mxu0 0.0
    %122 = vmatpush.msra.mxu0 0.0
    %123 = vmatpush.msra.mxu0 0.0
    %124 = vmatpush.msra.mxu0 0.0
    %125 = vmatpush.msra.mxu0 0.0
    %126 = vmatpush.msra.mxu0 0.0
    %127 = vmatpush.msra.mxu0 0.0
    %128 = vmatpush.msra.mxu0 0.0
    %129 = vmatpush.msra.mxu0 0.0
    %130 = vmatpush.msra.mxu0 0.0
    %131 = vmatpush.msra.mxu0 0.0
    %132 = vmatpush.msra.mxu0 %v45
    %133 = vmatmul.f32.gmra.mxu0 %v106
    %v134 = vpop.f32.mrf.mxu0
    %v135 = vadd.f32 0.0, %v134
    %136 = vmatmul.f32.gmra.mxu0 %v109
    %v137 = vpop.f32.mrf.mxu0
    %v138 = vadd.f32 0.0, %v137
    %139 = vmatmul.f32.gmra.mxu0 %v112
    %v140 = vpop.f32.mrf.mxu0
    %v141 = vadd.f32 0.0, %v140
    %142 = vmatmul.f32.gmra.mxu0 %v115
    %v143 = vpop.f32.mrf.mxu0
    %v144 = vadd.f32 0.0, %v143
    %145 = vdwg.mxu0
    %v147 = vsel %vm104, %v100, 0
    %v150 = vsel %vm104, %v101, 0
    %v153 = vsel %vm104, %v102, 0
    %v156 = vsel %vm104, %v103, 0
    %158 = vmatpush.msra.mxu0 0.0
    %159 = vmatpush.msra.mxu0 0.0
    %160 = vmatpush.msra.mxu0 0.0
    %161 = vmatpush.msra.mxu0 0.0
    %162 = vmatpush.msra.mxu0 0.0
    %163 = vmatpush.msra.mxu0 0.0
    %164 = vmatpush.msra.mxu0 0.0
    %165 = vmatpush.msra.mxu0 0.0
    %166 = vmatpush.msra.mxu0 0.0
    %167 = vmatpush.msra.mxu0 0.0
    %168 = vmatpush.msra.mxu0 0.0
    %169 = vmatpush.msra.mxu0 0.0
    %170 = vmatpush.msra.mxu0 0.0
    %171 = vmatpush.msra.mxu0 0.0
    %172 = vmatpush.msra.mxu0 0.0
    %173 = vmatpush.msra.mxu0 %v45
    %174 = vmatmul.f32.gmra.mxu0 %v147
    %v175 = vpop.f32.mrf.mxu0
    %v176 = vadd.f32 0.0, %v175
    %177 = vmatmul.f32.gmra.mxu0 %v150
    %v178 = vpop.f32.mrf.mxu0
    %v179 = vadd.f32 0.0, %v178
    %180 = vmatmul.f32.gmra.mxu0 %v153
    %v181 = vpop.f32.mrf.mxu0
    %v182 = vadd.f32 0.0, %v181
    %183 = vmatmul.f32.gmra.mxu0 %v156
    %v184 = vpop.f32.mrf.mxu0
    %v185 = vadd.f32 0.0, %v184
    %186 = vdwg.mxu0
    %v187 = vmul.f32 %v176, %v176
    %v188 = vmul.f32 %v179, %v179
    %v189 = vmul.f32 %v182, %v182
    %v190 = vmul.f32 %v185, %v185
    %v191 = vld [vmem:[%s3] sm:$0xff]
    %v192 = vld [vmem:[%s3 + $0x8] sm:$0xff]
    %v193 = vld [vmem:[%s4] sm:$0xff]
    %v194 = vld [vmem:[%s4 + $0x8] sm:$0xff]
    %vm195 = vcmask 130048
    %v197 = vsel %vm195, %v176, 0
    %v200 = vsel %vm195, %v179, 0
    %v203 = vsel %vm195, %v182, 0
    %v206 = vsel %vm195, %v185, 0
    %208 = vmatpush.msra.mxu0 0.0
    %209 = vmatpush.msra.mxu0 0.0
    %210 = vmatpush.msra.mxu0 0.0
    %211 = vmatpush.msra.mxu0 0.0
    %212 = vmatpush.msra.mxu0 0.0
    %213 = vmatpush.msra.mxu0 0.0
    %214 = vmatpush.msra.mxu0 0.0
    %215 = vmatpush.msra.mxu0 0.0
    %216 = vmatpush.msra.mxu0 0.0
    %217 = vmatpush.msra.mxu0 0.0
    %218 = vmatpush.msra.mxu0 0.0
    %219 = vmatpush.msra.mxu0 0.0
    %220 = vmatpush.msra.mxu0 0.0
    %221 = vmatpush.msra.mxu0 0.0
    %222 = vmatpush.msra.mxu0 %v194
    %223 = vmatpush.msra.mxu0 %v193
    %224 = vmatmul.f32.gmra.mxu0 %v197
    %v225 = vpop.f32.mrf.mxu0
    %v226 = vadd.f32 0.0, %v225
    %227 = vmatmul.f32.gmra.mxu0 %v200
    %v228 = vpop.f32.mrf.mxu0
    %v229 = vadd.f32 0.0, %v228
    %230 = vmatmul.f32.gmra.mxu0 %v203
    %v231 = vpop.f32.mrf.mxu0
    %v232 = vadd.f32 0.0, %v231
    %233 = vmatmul.f32.gmra.mxu0 %v206
    %v234 = vpop.f32.mrf.mxu0
    %v235 = vadd.f32 0.0, %v234
    %236 = vdwg.mxu0
    %v238 = vsel %vm195, %v135, 0
    %v241 = vsel %vm195, %v138, 0
    %v244 = vsel %vm195, %v141, 0
    %v247 = vsel %vm195, %v144, 0
    %249 = vmatpush.msra.mxu0 0.0
    %250 = vmatpush.msra.mxu0 0.0
    %251 = vmatpush.msra.mxu0 0.0
    %252 = vmatpush.msra.mxu0 0.0
    %253 = vmatpush.msra.mxu0 0.0
    %254 = vmatpush.msra.mxu0 0.0
    %255 = vmatpush.msra.mxu0 0.0
    %256 = vmatpush.msra.mxu0 0.0
    %257 = vmatpush.msra.mxu0 0.0
    %258 = vmatpush.msra.mxu0 0.0
    %259 = vmatpush.msra.mxu0 0.0
    %260 = vmatpush.msra.mxu0 0.0
    %261 = vmatpush.msra.mxu0 0.0
    %262 = vmatpush.msra.mxu0 0.0
    %263 = vmatpush.msra.mxu0 %v192
    %264 = vmatpush.msra.mxu0 %v191
    %265 = vmatmul.f32.gmra.mxu0 %v238
    %v266 = vpop.f32.mrf.mxu0
    %v267 = vadd.f32 %v226, %v266
    %268 = vmatmul.f32.gmra.mxu0 %v241
    %v269 = vpop.f32.mrf.mxu0
    %v270 = vadd.f32 %v229, %v269
    %271 = vmatmul.f32.gmra.mxu0 %v244
    %v272 = vpop.f32.mrf.mxu0
    %v273 = vadd.f32 %v232, %v272
    %274 = vmatmul.f32.gmra.mxu0 %v247
    %v275 = vpop.f32.mrf.mxu0
    %v276 = vadd.f32 %v235, %v275
    %277 = vdwg.mxu0
    %v278 = vld [vmem:[%s5] sm:$0x1]
    %v280 = vperm.slane %v278, 0
    %v282 = vadd.f32 %v267, %v280
    %v283 = vadd.f32 %v270, %v280
    %v284 = vadd.f32 %v273, %v280
    %v285 = vadd.f32 %v276, %v280
    %vm286 = vcmp.ge.f32.partialorder %v282, 0.0
    %vm287 = vcmp.ge.f32.partialorder %v283, 0.0
    %vm288 = vcmp.ge.f32.partialorder %v284, 0.0
    %vm289 = vcmp.ge.f32.partialorder %v285, 0.0
    %v290 = vmul.f32 %v282, 0.01
    %v291 = vmul.f32 %v283, 0.01
    %v292 = vmul.f32 %v284, 0.01
    %v293 = vmul.f32 %v285, 0.01
    %v294 = vsel %vm286, %v282, %v290
    %v295 = vsel %vm287, %v283, %v291
    %v296 = vsel %vm288, %v284, %v292
    %v297 = vsel %vm289, %v285, %v293
    %v298 = vld [vmem:[%s6] sm:$0xff]
    %v299 = vld [vmem:[%s6 + $0x8] sm:$0xff]
    %v300 = vld [vmem:[%s6 + $0x10] sm:$0xff]
    %v301 = vld [vmem:[%s6 + $0x18] sm:$0xff]
    %v302 = vld [vmem:[%s6 + $0x20] sm:$0xff]
    %v303 = vld [vmem:[%s6 + $0x28] sm:$0xff]
    %v304 = vld [vmem:[%s6 + $0x30] sm:$0xff]
    %v305 = vld [vmem:[%s6 + $0x38] sm:$0xff]
    %v306 = vld [vmem:[%s6 + $0x40] sm:$0xff]
    %v307 = vld [vmem:[%s6 + $0x48] sm:$0xff]
    %v308 = vld [vmem:[%s6 + $0x50] sm:$0xff]
    %v309 = vld [vmem:[%s6 + $0x58] sm:$0xff]
    %v310 = vld [vmem:[%s7] sm:$0x1]
    %v312 = vperm.slane %v310, 0
    %vm314 = vcmask 785408
    %v316 = vsel %vm314, %v294, 0
    %v319 = vsel %vm314, %v295, 0
    %v322 = vsel %vm314, %v296, 0
    %v325 = vsel %vm314, %v297, 0
    %327 = vmatpush.msra.mxu0 0.0
    %328 = vmatpush.msra.mxu0 0.0
    %329 = vmatpush.msra.mxu0 0.0
    %330 = vmatpush.msra.mxu0 0.0
    %331 = vmatpush.msra.mxu0 %v309
    %332 = vmatpush.msra.mxu0 %v308
    %333 = vmatpush.msra.mxu0 %v307
    %334 = vmatpush.msra.mxu0 %v306
    %335 = vmatpush.msra.mxu0 %v305
    %336 = vmatpush.msra.mxu0 %v304
    %337 = vmatpush.msra.mxu0 %v303
    %338 = vmatpush.msra.mxu0 %v302
    %339 = vmatpush.msra.mxu0 %v301
    %340 = vmatpush.msra.mxu0 %v300
    %341 = vmatpush.msra.mxu0 %v299
    %342 = vmatpush.msra.mxu0 %v298
    %343 = vmatmul.f32.gmra.mxu0 %v316
    %v344 = vpop.f32.mrf.mxu0
    %v345 = vadd.f32 %v312, %v344
    %346 = vmatmul.f32.gmra.mxu0 %v319
    %v347 = vpop.f32.mrf.mxu0
    %v348 = vadd.f32 %v312, %v347
    %349 = vmatmul.f32.gmra.mxu0 %v322
    %v350 = vpop.f32.mrf.mxu0
    %v351 = vadd.f32 %v312, %v350
    %352 = vmatmul.f32.gmra.mxu0 %v325
    %v353 = vpop.f32.mrf.mxu0
    %v354 = vadd.f32 %v312, %v353
    %355 = vdwg.mxu0
    %v356 = vld [vmem:[%s8] sm:$0xff]
    %v357 = vld [vmem:[%s8 + $0x8] sm:$0xff]
    %v358 = vld [vmem:[%s9] sm:$0xff]
    %v359 = vld [vmem:[%s9 + $0x8] sm:$0xff]
    %360 = vmatpush.msra.mxu0 0.0
    %361 = vmatpush.msra.mxu0 0.0
    %362 = vmatpush.msra.mxu0 0.0
    %363 = vmatpush.msra.mxu0 0.0
    %364 = vmatpush.msra.mxu0 0.0
    %365 = vmatpush.msra.mxu0 0.0
    %366 = vmatpush.msra.mxu0 0.0
    %367 = vmatpush.msra.mxu0 0.0
    %368 = vmatpush.msra.mxu0 0.0
    %369 = vmatpush.msra.mxu0 0.0
    %370 = vmatpush.msra.mxu0 0.0
    %371 = vmatpush.msra.mxu0 0.0
    %372 = vmatpush.msra.mxu0 0.0
    %373 = vmatpush.msra.mxu0 0.0
    %374 = vmatpush.msra.mxu0 %v359
    %375 = vmatpush.msra.mxu0 %v358
    %376 = vmatmul.f32.gmra.mxu0 %v197
    %v377 = vpop.f32.mrf.mxu0
    %v378 = vadd.f32 0.0, %v377
    %379 = vmatmul.f32.gmra.mxu0 %v200
    %v380 = vpop.f32.mrf.mxu0
    %v381 = vadd.f32 0.0, %v380
    %382 = vmatmul.f32.gmra.mxu0 %v203
    %v383 = vpop.f32.mrf.mxu0
    %v384 = vadd.f32 0.0, %v383
    %385 = vmatmul.f32.gmra.mxu0 %v206
    %v386 = vpop.f32.mrf.mxu0
    %v387 = vadd.f32 0.0, %v386
    %388 = vdwg.mxu0
    %389 = vmatpush.msra.mxu0 0.0
    %390 = vmatpush.msra.mxu0 0.0
    %391 = vmatpush.msra.mxu0 0.0
    %392 = vmatpush.msra.mxu0 0.0
    %393 = vmatpush.msra.mxu0 0.0
    %394 = vmatpush.msra.mxu0 0.0
    %395 = vmatpush.msra.mxu0 0.0
    %396 = vmatpush.msra.mxu0 0.0
    %397 = vmatpush.msra.mxu0 0.0
    %398 = vmatpush.msra.mxu0 0.0
    %399 = vmatpush.msra.mxu0 0.0
    %400 = vmatpush.msra.mxu0 0.0
    %401 = vmatpush.msra.mxu0 0.0
    %402 = vmatpush.msra.mxu0 0.0
    %403 = vmatpush.msra.mxu0 %v357
    %404 = vmatpush.msra.mxu0 %v356
    %405 = vmatmul.f32.gmra.mxu0 %v238
    %v406 = vpop.f32.mrf.mxu0
    %v407 = vadd.f32 %v378, %v406
    %408 = vmatmul.f32.gmra.mxu0 %v241
    %v409 = vpop.f32.mrf.mxu0
    %v410 = vadd.f32 %v381, %v409
    %411 = vmatmul.f32.gmra.mxu0 %v244
    %v412 = vpop.f32.mrf.mxu0
    %v413 = vadd.f32 %v384, %v412
    %414 = vmatmul.f32.gmra.mxu0 %v247
    %v415 = vpop.f32.mrf.mxu0
    %v416 = vadd.f32 %v387, %v415
    %417 = vdwg.mxu0
    %v418 = vld [vmem:[%s10] sm:$0x1]
    %v420 = vperm.slane %v418, 0
    %v422 = vadd.f32 %v407, %v420
    %v423 = vadd.f32 %v410, %v420
    %v424 = vadd.f32 %v413, %v420
    %v425 = vadd.f32 %v416, %v420
    %vm426 = vcmp.ge.f32.partialorder %v422, 0.0
    %vm427 = vcmp.ge.f32.partialorder %v423, 0.0
    %vm428 = vcmp.ge.f32.partialorder %v424, 0.0
    %vm429 = vcmp.ge.f32.partialorder %v425, 0.0
    %v430 = vmul.f32 %v422, 0.01
    %v431 = vmul.f32 %v423, 0.01
    %v432 = vmul.f32 %v424, 0.01
    %v433 = vmul.f32 %v425, 0.01
    %v434 = vsel %vm426, %v422, %v430
    %v435 = vsel %vm427, %v423, %v431
    %v436 = vsel %vm428, %v424, %v432
    %v437 = vsel %vm429, %v425, %v433
    %v438 = vld [vmem:[%s12] sm:$0x7]
    %440 = vset.pattern.permute.xlu0 0
    %441 = vperm.xlu0 %440, %v345
    %v442 = vpop.permute.xlu0 %441
    %445 = vset.pattern.permute.xlu0 0
    %446 = vperm.xlu0 %445, %v348
    %v447 = vpop.permute.xlu0 %446
    %450 = vset.pattern.permute.xlu0 0
    %451 = vperm.xlu0 %450, %v351
    %v452 = vpop.permute.xlu0 %451
    %455 = vset.pattern.permute.xlu0 0
    %456 = vperm.xlu0 %455, %v354
    %v457 = vpop.permute.xlu0 %456
    %v459 = vsel %vm68, %v442, -1e+30
    %v460 = vsel %vm69, %v447, -1e+30
    %v461 = vsel %vm70, %v452, -1e+30
    %v462 = vsel %vm71, %v457, -1e+30
    %v463 = vsel %vm104, %v459, -inf
    %v464 = vsel %vm104, %v460, -inf
    %v465 = vsel %vm104, %v461, -inf
    %v466 = vsel %vm104, %v462, -inf
    %v467 = vmax.f32 %v463, %v464
    %v468 = vmax.f32 %v465, %v466
    %v469 = vmax.f32 %v467, %v468
    %v470 = vrot.slane %v469, 4
    %v471 = vmax.f32 %v469, %v470
    %v472 = vrot.slane %v471, 2
    %v473 = vmax.f32 %v471, %v472
    %v474 = vrot.slane %v473, 1
    %v475 = vmax.f32 %v473, %v474
    %v476 = vmul.f32 %v76, %v475
    %v477 = vmul.f32 %v77, %v475
    %v478 = vmul.f32 %v78, %v475
    %v479 = vmul.f32 %v79, %v475
    %v480 = vsel %vm104, %v476, 0.0
    %481 = vadd.xlane.f32.xlu0 %v480
    %v482 = vpop.xlane.xlu0 %481
    %v483 = vsel %vm104, %v477, 0.0
    %484 = vadd.xlane.f32.xlu0 %v483
    %v485 = vpop.xlane.xlu0 %484
    %v486 = vsel %vm104, %v478, 0.0
    %487 = vadd.xlane.f32.xlu0 %v486
    %v488 = vpop.xlane.xlu0 %487
    %v489 = vsel %vm104, %v479, 0.0
    %490 = vadd.xlane.f32.xlu0 %v489
    %v491 = vpop.xlane.xlu0 %490
    %v492 = vsub.f32 %v345, %v482
    %v493 = vsub.f32 %v348, %v485
    %v494 = vsub.f32 %v351, %v488
    %v495 = vsub.f32 %v354, %v491
    %v496 = vmul.f32 %v492, 1.442695
    %v497 = vpow.pop %v496
    %v498 = vmul.f32 %v493, 1.442695
    %v499 = vpow.pop %v498
    %v500 = vmul.f32 %v494, 1.442695
    %v501 = vpow.pop %v500
    %v502 = vmul.f32 %v495, 1.442695
    %v503 = vpow.pop %v502
    %508 = vrot.lane.b32.xlu0 %v497, 16
    %v509 = vpop.permute.xlu0 %508
    %510 = vrot.lane.b32.xlu0 %v499, 16
    %v511 = vpop.permute.xlu0 %510
    %512 = vrot.lane.b32.xlu0 %v501, 16
    %v513 = vpop.permute.xlu0 %512
    %514 = vrot.lane.b32.xlu0 %v503, 16
    %v515 = vpop.permute.xlu0 %514
    %v520 = vmul.f32 %v187, %v509
    %v521 = vmul.f32 %v188, %v511
    %v522 = vmul.f32 %v189, %v513
    %v523 = vmul.f32 %v190, %v515
    %525 = vset.pattern.permute.xlu0 16
    %526 = vperm.xlu0 %525, %v520
    %v527 = vpop.permute.xlu0 %526
    %530 = vset.pattern.permute.xlu0 16
    %531 = vperm.xlu0 %530, %v521
    %v532 = vpop.permute.xlu0 %531
    %535 = vset.pattern.permute.xlu0 16
    %536 = vperm.xlu0 %535, %v522
    %v537 = vpop.permute.xlu0 %536
    %540 = vset.pattern.permute.xlu0 16
    %541 = vperm.xlu0 %540, %v523
    %v542 = vpop.permute.xlu0 %541
    %v544 = vsel %vm68, %v527, 0.0
    %v545 = vsel %vm69, %v532, 0.0
    %v546 = vsel %vm70, %v537, 0.0
    %v547 = vsel %vm71, %v542, 0.0
    %v548 = vsel %vm104, %v544, 0.0
    %v549 = vsel %vm104, %v545, 0.0
    %v550 = vadd.f32 %v548, %v549
    %v551 = vsel %vm104, %v546, 0.0
    %v552 = vadd.f32 %v550, %v551
    %v553 = vsel %vm104, %v547, 0.0
    %v554 = vadd.f32 %v552, %v553
    %v555 = vrot.slane %v554, 4
    %v556 = vadd.f32 %v554, %v555
    %v557 = vrot.slane %v556, 2
    %v558 = vadd.f32 %v556, %v557
    %v559 = vrot.slane %v558, 1
    %v560 = vadd.f32 %v558, %v559
    %v561 = vmul.f32 %v76, %v560
    %v562 = vmul.f32 %v77, %v560
    %v563 = vmul.f32 %v78, %v560
    %v564 = vmul.f32 %v79, %v560
    %v565 = vsel %vm104, %v561, 0.0
    %566 = vadd.xlane.f32.xlu0 %v565
    %v567 = vpop.xlane.xlu0 %566
    %v568 = vsel %vm104, %v562, 0.0
    %569 = vadd.xlane.f32.xlu0 %v568
    %v570 = vpop.xlane.xlu0 %569
    %v571 = vsel %vm104, %v563, 0.0
    %572 = vadd.xlane.f32.xlu0 %v571
    %v573 = vpop.xlane.xlu0 %572
    %v574 = vsel %vm104, %v564, 0.0
    %575 = vadd.xlane.f32.xlu0 %v574
    %v576 = vpop.xlane.xlu0 %575
    %v577 = vadd.f32 %v567, 1e-10
    %v578 = vadd.f32 %v570, 1e-10
    %v579 = vadd.f32 %v573, 1e-10
    %v580 = vadd.f32 %v576, 1e-10
    %v581 = vrcp.pop %v577
    %v582 = vmul.f32 %v577, %v581
    %v583 = vsub.f32 1.0, %v582
    %v584 = vmul.f32 %v581, %v583
    %v585 = vadd.f32 %v581, %v584
    %vm586 = vweird.f32 %v577
    %vm587 = vweird.f32 %v581
    %vm588 = vmor %vm586, %vm587
    %v589 = vsel %vm588, %v581, %v585
    %v590 = vand.u32 2147483647, %v577
    %vm591 = vcmp.eq.f32.partialorder %v590, 8.507059e+37
    %v592 = vand.u32 %v577, 2147483648
    %v593 = vor.u32 1.1754944e-38, %v592
    %v594 = vsel %vm591, %v593, %v589
    %v595 = vmul.f32 %v520, %v594
    %v596 = vrcp.pop %v578
    %v597 = vmul.f32 %v578, %v596
    %v598 = vsub.f32 1.0, %v597
    %v599 = vmul.f32 %v596, %v598
    %v600 = vadd.f32 %v596, %v599
    %vm601 = vweird.f32 %v578
    %vm602 = vweird.f32 %v596
    %vm603 = vmor %vm601, %vm602
    %v604 = vsel %vm603, %v596, %v600
    %v605 = vand.u32 2147483647, %v578
    %vm606 = vcmp.eq.f32.partialorder %v605, 8.507059e+37
    %v607 = vand.u32 %v578, 2147483648
    %v608 = vor.u32 1.1754944e-38, %v607
    %v609 = vsel %vm606, %v608, %v604
    %v610 = vmul.f32 %v521, %v609
    %v611 = vrcp.pop %v579
    %v612 = vmul.f32 %v579, %v611
    %v613 = vsub.f32 1.0, %v612
    %v614 = vmul.f32 %v611, %v613
    %v615 = vadd.f32 %v611, %v614
    %vm616 = vweird.f32 %v579
    %vm617 = vweird.f32 %v611
    %vm618 = vmor %vm616, %vm617
    %v619 = vsel %vm618, %v611, %v615
    %v620 = vand.u32 2147483647, %v579
    %vm621 = vcmp.eq.f32.partialorder %v620, 8.507059e+37
    %v622 = vand.u32 %v579, 2147483648
    %v623 = vor.u32 1.1754944e-38, %v622
    %v624 = vsel %vm621, %v623, %v619
    %v625 = vmul.f32 %v522, %v624
    %v626 = vrcp.pop %v580
    %v627 = vmul.f32 %v580, %v626
    %v628 = vsub.f32 1.0, %v627
    %v629 = vmul.f32 %v626, %v628
    %v630 = vadd.f32 %v626, %v629
    %vm631 = vweird.f32 %v580
    %vm632 = vweird.f32 %v626
    %vm633 = vmor %vm631, %vm632
    %v634 = vsel %vm633, %v626, %v630
    %v635 = vand.u32 2147483647, %v580
    %vm636 = vcmp.eq.f32.partialorder %v635, 8.507059e+37
    %v637 = vand.u32 %v580, 2147483648
    %v638 = vor.u32 1.1754944e-38, %v637
    %v639 = vsel %vm636, %v638, %v634
    %v640 = vmul.f32 %v523, %v639
    %642 = vset.pattern.permute.xlu0 16
    %643 = vperm.xlu0 %642, %v595
    %v644 = vpop.permute.xlu0 %643
    %647 = vset.pattern.permute.xlu0 16
    %648 = vperm.xlu0 %647, %v610
    %v649 = vpop.permute.xlu0 %648
    %652 = vset.pattern.permute.xlu0 16
    %653 = vperm.xlu0 %652, %v625
    %v654 = vpop.permute.xlu0 %653
    %657 = vset.pattern.permute.xlu0 16
    %658 = vperm.xlu0 %657, %v640
    %v659 = vpop.permute.xlu0 %658
    %v661 = vperm.slane %v438, 0
    %v662 = vmul.f32 %v644, %v661
    %v663 = vmul.f32 %v649, %v661
    %v664 = vmul.f32 %v654, %v661
    %v665 = vmul.f32 %v659, %v661
    %v666 = vadd.f32 %v662, 0.0
    %v667 = vadd.f32 %v663, 0.0
    %v668 = vadd.f32 %v664, 0.0
    %v669 = vadd.f32 %v665, 0.0
    %670 = vset.pattern.permute.xlu0 1
    %671 = vperm.xlu0 %670, %v345
    %v672 = vpop.permute.xlu0 %671
    %674 = vset.pattern.permute.xlu0 1
    %675 = vperm.xlu0 %674, %v348
    %v676 = vpop.permute.xlu0 %675
    %678 = vset.pattern.permute.xlu0 1
    %679 = vperm.xlu0 %678, %v351
    %v680 = vpop.permute.xlu0 %679
    %682 = vset.pattern.permute.xlu0 1
    %683 = vperm.xlu0 %682, %v354
    %v684 = vpop.permute.xlu0 %683
    %v686 = vsel %vm68, %v672, -1e+30
    %v687 = vsel %vm69, %v676, -1e+30
    %v688 = vsel %vm70, %v680, -1e+30
    %v689 = vsel %vm71, %v684, -1e+30
    %v690 = vsel %vm104, %v686, -inf
    %v691 = vsel %vm104, %v687, -inf
    %v692 = vsel %vm104, %v688, -inf
    %v693 = vsel %vm104, %v689, -inf
    %v694 = vmax.f32 %v690, %v691
    %v695 = vmax.f32 %v692, %v693
    %v696 = vmax.f32 %v694, %v695
    %v697 = vrot.slane %v696, 4
    %v698 = vmax.f32 %v696, %v697
    %v699 = vrot.slane %v698, 2
    %v700 = vmax.f32 %v698, %v699
    %v701 = vrot.slane %v700, 1
    %v702 = vmax.f32 %v700, %v701
    %v703 = vmul.f32 %v76, %v702
    %v704 = vmul.f32 %v77, %v702
    %v705 = vmul.f32 %v78, %v702
    %v706 = vmul.f32 %v79, %v702
    %v707 = vsel %vm104, %v703, 0.0
    %708 = vadd.xlane.f32.xlu0 %v707
    %v709 = vpop.xlane.xlu0 %708
    %v710 = vsel %vm104, %v704, 0.0
    %711 = vadd.xlane.f32.xlu0 %v710
    %v712 = vpop.xlane.xlu0 %711
    %v713 = vsel %vm104, %v705, 0.0
    %714 = vadd.xlane.f32.xlu0 %v713
    %v715 = vpop.xlane.xlu0 %714
    %v716 = vsel %vm104, %v706, 0.0
    %717 = vadd.xlane.f32.xlu0 %v716
    %v718 = vpop.xlane.xlu0 %717
    %v719 = vsub.f32 %v345, %v709
    %v720 = vsub.f32 %v348, %v712
    %v721 = vsub.f32 %v351, %v715
    %v722 = vsub.f32 %v354, %v718
    %v723 = vmul.f32 %v719, 1.442695
    %v724 = vpow.pop %v723
    %v725 = vmul.f32 %v720, 1.442695
    %v726 = vpow.pop %v725
    %v727 = vmul.f32 %v721, 1.442695
    %v728 = vpow.pop %v727
    %v729 = vmul.f32 %v722, 1.442695
    %v730 = vpow.pop %v729
    %735 = vrot.lane.b32.xlu0 %v724, 15
    %v736 = vpop.permute.xlu0 %735
    %737 = vrot.lane.b32.xlu0 %v726, 15
    %v738 = vpop.permute.xlu0 %737
    %739 = vrot.lane.b32.xlu0 %v728, 15
    %v740 = vpop.permute.xlu0 %739
    %741 = vrot.lane.b32.xlu0 %v730, 15
    %v742 = vpop.permute.xlu0 %741
    %v747 = vmul.f32 %v187, %v736
    %v748 = vmul.f32 %v188, %v738
    %v749 = vmul.f32 %v189, %v740
    %v750 = vmul.f32 %v190, %v742
    %752 = vset.pattern.permute.xlu0 16
    %753 = vperm.xlu0 %752, %v747
    %v754 = vpop.permute.xlu0 %753
    %757 = vset.pattern.permute.xlu0 16
    %758 = vperm.xlu0 %757, %v748
    %v759 = vpop.permute.xlu0 %758
    %762 = vset.pattern.permute.xlu0 16
    %763 = vperm.xlu0 %762, %v749
    %v764 = vpop.permute.xlu0 %763
    %767 = vset.pattern.permute.xlu0 16
    %768 = vperm.xlu0 %767, %v750
    %v769 = vpop.permute.xlu0 %768
    %v771 = vsel %vm68, %v754, 0.0
    %v772 = vsel %vm69, %v759, 0.0
    %v773 = vsel %vm70, %v764, 0.0
    %v774 = vsel %vm71, %v769, 0.0
    %v775 = vsel %vm104, %v771, 0.0
    %v776 = vsel %vm104, %v772, 0.0
    %v777 = vadd.f32 %v775, %v776
    %v778 = vsel %vm104, %v773, 0.0
    %v779 = vadd.f32 %v777, %v778
    %v780 = vsel %vm104, %v774, 0.0
    %v781 = vadd.f32 %v779, %v780
    %v782 = vrot.slane %v781, 4
    %v783 = vadd.f32 %v781, %v782
    %v784 = vrot.slane %v783, 2
    %v785 = vadd.f32 %v783, %v784
    %v786 = vrot.slane %v785, 1
    %v787 = vadd.f32 %v785, %v786
    %v788 = vmul.f32 %v76, %v787
    %v789 = vmul.f32 %v77, %v787
    %v790 = vmul.f32 %v78, %v787
    %v791 = vmul.f32 %v79, %v787
    %v792 = vsel %vm104, %v788, 0.0
    %793 = vadd.xlane.f32.xlu0 %v792
    %v794 = vpop.xlane.xlu0 %793
    %v795 = vsel %vm104, %v789, 0.0
    %796 = vadd.xlane.f32.xlu0 %v795
    %v797 = vpop.xlane.xlu0 %796
    %v798 = vsel %vm104, %v790, 0.0
    %799 = vadd.xlane.f32.xlu0 %v798
    %v800 = vpop.xlane.xlu0 %799
    %v801 = vsel %vm104, %v791, 0.0
    %802 = vadd.xlane.f32.xlu0 %v801
    %v803 = vpop.xlane.xlu0 %802
    %v804 = vadd.f32 %v794, 1e-10
    %v805 = vadd.f32 %v797, 1e-10
    %v806 = vadd.f32 %v800, 1e-10
    %v807 = vadd.f32 %v803, 1e-10
    %v808 = vrcp.pop %v804
    %v809 = vmul.f32 %v804, %v808
    %v810 = vsub.f32 1.0, %v809
    %v811 = vmul.f32 %v808, %v810
    %v812 = vadd.f32 %v808, %v811
    %vm813 = vweird.f32 %v804
    %vm814 = vweird.f32 %v808
    %vm815 = vmor %vm813, %vm814
    %v816 = vsel %vm815, %v808, %v812
    %v817 = vand.u32 2147483647, %v804
    %vm818 = vcmp.eq.f32.partialorder %v817, 8.507059e+37
    %v819 = vand.u32 %v804, 2147483648
    %v820 = vor.u32 1.1754944e-38, %v819
    %v821 = vsel %vm818, %v820, %v816
    %v822 = vmul.f32 %v747, %v821
    %v823 = vrcp.pop %v805
    %v824 = vmul.f32 %v805, %v823
    %v825 = vsub.f32 1.0, %v824
    %v826 = vmul.f32 %v823, %v825
    %v827 = vadd.f32 %v823, %v826
    %vm828 = vweird.f32 %v805
    %vm829 = vweird.f32 %v823
    %vm830 = vmor %vm828, %vm829
    %v831 = vsel %vm830, %v823, %v827
    %v832 = vand.u32 2147483647, %v805
    %vm833 = vcmp.eq.f32.partialorder %v832, 8.507059e+37
    %v834 = vand.u32 %v805, 2147483648
    %v835 = vor.u32 1.1754944e-38, %v834
    %v836 = vsel %vm833, %v835, %v831
    %v837 = vmul.f32 %v748, %v836
    %v838 = vrcp.pop %v806
    %v839 = vmul.f32 %v806, %v838
    %v840 = vsub.f32 1.0, %v839
    %v841 = vmul.f32 %v838, %v840
    %v842 = vadd.f32 %v838, %v841
    %vm843 = vweird.f32 %v806
    %vm844 = vweird.f32 %v838
    %vm845 = vmor %vm843, %vm844
    %v846 = vsel %vm845, %v838, %v842
    %v847 = vand.u32 2147483647, %v806
    %vm848 = vcmp.eq.f32.partialorder %v847, 8.507059e+37
    %v849 = vand.u32 %v806, 2147483648
    %v850 = vor.u32 1.1754944e-38, %v849
    %v851 = vsel %vm848, %v850, %v846
    %v852 = vmul.f32 %v749, %v851
    %v853 = vrcp.pop %v807
    %v854 = vmul.f32 %v807, %v853
    %v855 = vsub.f32 1.0, %v854
    %v856 = vmul.f32 %v853, %v855
    %v857 = vadd.f32 %v853, %v856
    %vm858 = vweird.f32 %v807
    %vm859 = vweird.f32 %v853
    %vm860 = vmor %vm858, %vm859
    %v861 = vsel %vm860, %v853, %v857
    %v862 = vand.u32 2147483647, %v807
    %vm863 = vcmp.eq.f32.partialorder %v862, 8.507059e+37
    %v864 = vand.u32 %v807, 2147483648
    %v865 = vor.u32 1.1754944e-38, %v864
    %v866 = vsel %vm863, %v865, %v861
    %v867 = vmul.f32 %v750, %v866
    %869 = vset.pattern.permute.xlu0 16
    %870 = vperm.xlu0 %869, %v822
    %v871 = vpop.permute.xlu0 %870
    %874 = vset.pattern.permute.xlu0 16
    %875 = vperm.xlu0 %874, %v837
    %v876 = vpop.permute.xlu0 %875
    %879 = vset.pattern.permute.xlu0 16
    %880 = vperm.xlu0 %879, %v852
    %v881 = vpop.permute.xlu0 %880
    %884 = vset.pattern.permute.xlu0 16
    %885 = vperm.xlu0 %884, %v867
    %v886 = vpop.permute.xlu0 %885
    %v888 = vperm.slane %v438, 1
    %v889 = vmul.f32 %v871, %v888
    %v890 = vmul.f32 %v876, %v888
    %v891 = vmul.f32 %v881, %v888
    %v892 = vmul.f32 %v886, %v888
    %v893 = vadd.f32 %v666, %v889
    %v894 = vadd.f32 %v667, %v890
    %v895 = vadd.f32 %v668, %v891
    %v896 = vadd.f32 %v669, %v892
    %897 = vset.pattern.permute.xlu0 2
    %898 = vperm.xlu0 %897, %v345
    %v899 = vpop.permute.xlu0 %898
    %901 = vset.pattern.permute.xlu0 2
    %902 = vperm.xlu0 %901, %v348
    %v903 = vpop.permute.xlu0 %902
    %905 = vset.pattern.permute.xlu0 2
    %906 = vperm.xlu0 %905, %v351
    %v907 = vpop.permute.xlu0 %906
    %909 = vset.pattern.permute.xlu0 2
    %910 = vperm.xlu0 %909, %v354
    %v911 = vpop.permute.xlu0 %910
    %v913 = vsel %vm68, %v899, -1e+30
    %v914 = vsel %vm69, %v903, -1e+30
    %v915 = vsel %vm70, %v907, -1e+30
    %v916 = vsel %vm71, %v911, -1e+30
    %v917 = vsel %vm104, %v913, -inf
    %v918 = vsel %vm104, %v914, -inf
    %v919 = vsel %vm104, %v915, -inf
    %v920 = vsel %vm104, %v916, -inf
    %v921 = vmax.f32 %v917, %v918
    %v922 = vmax.f32 %v919, %v920
    %v923 = vmax.f32 %v921, %v922
    %v924 = vrot.slane %v923, 4
    %v925 = vmax.f32 %v923, %v924
    %v926 = vrot.slane %v925, 2
    %v927 = vmax.f32 %v925, %v926
    %v928 = vrot.slane %v927, 1
    %v929 = vmax.f32 %v927, %v928
    %v930 = vmul.f32 %v76, %v929
    %v931 = vmul.f32 %v77, %v929
    %v932 = vmul.f32 %v78, %v929
    %v933 = vmul.f32 %v79, %v929
    %v934 = vsel %vm104, %v930, 0.0
    %935 = vadd.xlane.f32.xlu0 %v934
    %v936 = vpop.xlane.xlu0 %935
    %v937 = vsel %vm104, %v931, 0.0
    %938 = vadd.xlane.f32.xlu0 %v937
    %v939 = vpop.xlane.xlu0 %938
    %v940 = vsel %vm104, %v932, 0.0
    %941 = vadd.xlane.f32.xlu0 %v940
    %v942 = vpop.xlane.xlu0 %941
    %v943 = vsel %vm104, %v933, 0.0
    %944 = vadd.xlane.f32.xlu0 %v943
    %v945 = vpop.xlane.xlu0 %944
    %v946 = vsub.f32 %v345, %v936
    %v947 = vsub.f32 %v348, %v939
    %v948 = vsub.f32 %v351, %v942
    %v949 = vsub.f32 %v354, %v945
    %v950 = vmul.f32 %v946, 1.442695
    %v951 = vpow.pop %v950
    %v952 = vmul.f32 %v947, 1.442695
    %v953 = vpow.pop %v952
    %v954 = vmul.f32 %v948, 1.442695
    %v955 = vpow.pop %v954
    %v956 = vmul.f32 %v949, 1.442695
    %v957 = vpow.pop %v956
    %962 = vrot.lane.b32.xlu0 %v951, 14
    %v963 = vpop.permute.xlu0 %962
    %964 = vrot.lane.b32.xlu0 %v953, 14
    %v965 = vpop.permute.xlu0 %964
    %966 = vrot.lane.b32.xlu0 %v955, 14
    %v967 = vpop.permute.xlu0 %966
    %968 = vrot.lane.b32.xlu0 %v957, 14
    %v969 = vpop.permute.xlu0 %968
    %v974 = vmul.f32 %v187, %v963
    %v975 = vmul.f32 %v188, %v965
    %v976 = vmul.f32 %v189, %v967
    %v977 = vmul.f32 %v190, %v969
    %979 = vset.pattern.permute.xlu0 16
    %980 = vperm.xlu0 %979, %v974
    %v981 = vpop.permute.xlu0 %980
    %984 = vset.pattern.permute.xlu0 16
    %985 = vperm.xlu0 %984, %v975
    %v986 = vpop.permute.xlu0 %985
    %989 = vset.pattern.permute.xlu0 16
    %990 = vperm.xlu0 %989, %v976
    %v991 = vpop.permute.xlu0 %990
    %994 = vset.pattern.permute.xlu0 16
    %995 = vperm.xlu0 %994, %v977
    %v996 = vpop.permute.xlu0 %995
    %v998 = vsel %vm68, %v981, 0.0
    %v999 = vsel %vm69, %v986, 0.0
    %v1000 = vsel %vm70, %v991, 0.0
    %v1001 = vsel %vm71, %v996, 0.0
    %v1002 = vsel %vm104, %v998, 0.0
    %v1003 = vsel %vm104, %v999, 0.0
    %v1004 = vadd.f32 %v1002, %v1003
    %v1005 = vsel %vm104, %v1000, 0.0
    %v1006 = vadd.f32 %v1004, %v1005
    %v1007 = vsel %vm104, %v1001, 0.0
    %v1008 = vadd.f32 %v1006, %v1007
    %v1009 = vrot.slane %v1008, 4
    %v1010 = vadd.f32 %v1008, %v1009
    %v1011 = vrot.slane %v1010, 2
    %v1012 = vadd.f32 %v1010, %v1011
    %v1013 = vrot.slane %v1012, 1
    %v1014 = vadd.f32 %v1012, %v1013
    %v1015 = vmul.f32 %v76, %v1014
    %v1016 = vmul.f32 %v77, %v1014
    %v1017 = vmul.f32 %v78, %v1014
    %v1018 = vmul.f32 %v79, %v1014
    %v1019 = vsel %vm104, %v1015, 0.0
    %1020 = vadd.xlane.f32.xlu0 %v1019
    %v1021 = vpop.xlane.xlu0 %1020
    %v1022 = vsel %vm104, %v1016, 0.0
    %1023 = vadd.xlane.f32.xlu0 %v1022
    %v1024 = vpop.xlane.xlu0 %1023
    %v1025 = vsel %vm104, %v1017, 0.0
    %1026 = vadd.xlane.f32.xlu0 %v1025
    %v1027 = vpop.xlane.xlu0 %1026
    %v1028 = vsel %vm104, %v1018, 0.0
    %1029 = vadd.xlane.f32.xlu0 %v1028
    %v1030 = vpop.xlane.xlu0 %1029
    %v1031 = vadd.f32 %v1021, 1e-10
    %v1032 = vadd.f32 %v1024, 1e-10
    %v1033 = vadd.f32 %v1027, 1e-10
    %v1034 = vadd.f32 %v1030, 1e-10
    %v1035 = vrcp.pop %v1031
    %v1036 = vmul.f32 %v1031, %v1035
    %v1037 = vsub.f32 1.0, %v1036
    %v1038 = vmul.f32 %v1035, %v1037
    %v1039 = vadd.f32 %v1035, %v1038
    %vm1040 = vweird.f32 %v1031
    %vm1041 = vweird.f32 %v1035
    %vm1042 = vmor %vm1040, %vm1041
    %v1043 = vsel %vm1042, %v1035, %v1039
    %v1044 = vand.u32 2147483647, %v1031
    %vm1045 = vcmp.eq.f32.partialorder %v1044, 8.507059e+37
    %v1046 = vand.u32 %v1031, 2147483648
    %v1047 = vor.u32 1.1754944e-38, %v1046
    %v1048 = vsel %vm1045, %v1047, %v1043
    %v1049 = vmul.f32 %v974, %v1048
    %v1050 = vrcp.pop %v1032
    %v1051 = vmul.f32 %v1032, %v1050
    %v1052 = vsub.f32 1.0, %v1051
    %v1053 = vmul.f32 %v1050, %v1052
    %v1054 = vadd.f32 %v1050, %v1053
    %vm1055 = vweird.f32 %v1032
    %vm1056 = vweird.f32 %v1050
    %vm1057 = vmor %vm1055, %vm1056
    %v1058 = vsel %vm1057, %v1050, %v1054
    %v1059 = vand.u32 2147483647, %v1032
    %vm1060 = vcmp.eq.f32.partialorder %v1059, 8.507059e+37
    %v1061 = vand.u32 %v1032, 2147483648
    %v1062 = vor.u32 1.1754944e-38, %v1061
    %v1063 = vsel %vm1060, %v1062, %v1058
    %v1064 = vmul.f32 %v975, %v1063
    %v1065 = vrcp.pop %v1033
    %v1066 = vmul.f32 %v1033, %v1065
    %v1067 = vsub.f32 1.0, %v1066
    %v1068 = vmul.f32 %v1065, %v1067
    %v1069 = vadd.f32 %v1065, %v1068
    %vm1070 = vweird.f32 %v1033
    %vm1071 = vweird.f32 %v1065
    %vm1072 = vmor %vm1070, %vm1071
    %v1073 = vsel %vm1072, %v1065, %v1069
    %v1074 = vand.u32 2147483647, %v1033
    %vm1075 = vcmp.eq.f32.partialorder %v1074, 8.507059e+37
    %v1076 = vand.u32 %v1033, 2147483648
    %v1077 = vor.u32 1.1754944e-38, %v1076
    %v1078 = vsel %vm1075, %v1077, %v1073
    %v1079 = vmul.f32 %v976, %v1078
    %v1080 = vrcp.pop %v1034
    %v1081 = vmul.f32 %v1034, %v1080
    %v1082 = vsub.f32 1.0, %v1081
    %v1083 = vmul.f32 %v1080, %v1082
    %v1084 = vadd.f32 %v1080, %v1083
    %vm1085 = vweird.f32 %v1034
    %vm1086 = vweird.f32 %v1080
    %vm1087 = vmor %vm1085, %vm1086
    %v1088 = vsel %vm1087, %v1080, %v1084
    %v1089 = vand.u32 2147483647, %v1034
    %vm1090 = vcmp.eq.f32.partialorder %v1089, 8.507059e+37
    %v1091 = vand.u32 %v1034, 2147483648
    %v1092 = vor.u32 1.1754944e-38, %v1091
    %v1093 = vsel %vm1090, %v1092, %v1088
    %v1094 = vmul.f32 %v977, %v1093
    %1096 = vset.pattern.permute.xlu0 16
    %1097 = vperm.xlu0 %1096, %v1049
    %v1098 = vpop.permute.xlu0 %1097
    %1101 = vset.pattern.permute.xlu0 16
    %1102 = vperm.xlu0 %1101, %v1064
    %v1103 = vpop.permute.xlu0 %1102
    %1106 = vset.pattern.permute.xlu0 16
    %1107 = vperm.xlu0 %1106, %v1079
    %v1108 = vpop.permute.xlu0 %1107
    %1111 = vset.pattern.permute.xlu0 16
    %1112 = vperm.xlu0 %1111, %v1094
    %v1113 = vpop.permute.xlu0 %1112
    %v1115 = vperm.slane %v438, 2
    %v1116 = vmul.f32 %v1098, %v1115
    %v1117 = vmul.f32 %v1103, %v1115
    %v1118 = vmul.f32 %v1108, %v1115
    %v1119 = vmul.f32 %v1113, %v1115
    %v1120 = vadd.f32 %v893, %v1116
    %v1121 = vadd.f32 %v894, %v1117
    %v1122 = vadd.f32 %v895, %v1118
    %v1123 = vadd.f32 %v896, %v1119
    %vm1124 = vcmask 261120
    %v1125 = vsel %vm1124, %v644, %v871
    %v1126 = vsel %vm1124, %v649, %v876
    %v1127 = vsel %vm1124, %v654, %v881
    %v1128 = vsel %vm1124, %v659, %v886
    %vm1129 = vcmask 523264
    %v1130 = vsel %vm1129, %v1125, %v1098
    %v1131 = vsel %vm1129, %v1126, %v1103
    %v1132 = vsel %vm1129, %v1127, %v1108
    %v1133 = vsel %vm1129, %v1128, %v1113
    %v1134 = vmul.f32 %v1130, %v434
    %v1135 = vmul.f32 %v1131, %v435
    %v1136 = vmul.f32 %v1132, %v436
    %v1137 = vmul.f32 %v1133, %v437
    %v1138 = vld [vmem:[%s11] sm:$0xff]
    %v1139 = vld [vmem:[%s11 + $0x8] sm:$0xff]
    %v1140 = vld [vmem:[%s11 + $0x10] sm:$0xff]
    %v1141 = vld [vmem:[%s11 + $0x18] sm:$0xff]
    %v1142 = vld [vmem:[%s11 + $0x20] sm:$0xff]
    %v1143 = vld [vmem:[%s11 + $0x28] sm:$0xff]
    %v1144 = vld [vmem:[%s11 + $0x30] sm:$0xff]
    %v1145 = vld [vmem:[%s11 + $0x38] sm:$0xff]
    %v1146 = vld [vmem:[%s11 + $0x40] sm:$0xff]
    %v1147 = vld [vmem:[%s11 + $0x48] sm:$0xff]
    %v1148 = vld [vmem:[%s11 + $0x50] sm:$0xff]
    %v1149 = vld [vmem:[%s11 + $0x58] sm:$0xff]
    %v1151 = vsel %vm314, %v1134, 0
    %v1154 = vsel %vm314, %v1135, 0
    %v1157 = vsel %vm314, %v1136, 0
    %v1160 = vsel %vm314, %v1137, 0
    %1162 = vmatpush.msra.mxu0 0.0
    %1163 = vmatpush.msra.mxu0 0.0
    %1164 = vmatpush.msra.mxu0 0.0
    %1165 = vmatpush.msra.mxu0 0.0
    %1166 = vmatpush.msra.mxu0 %v1149
    %1167 = vmatpush.msra.mxu0 %v1148
    %1168 = vmatpush.msra.mxu0 %v1147
    %1169 = vmatpush.msra.mxu0 %v1146
    %1170 = vmatpush.msra.mxu0 %v1145
    %1171 = vmatpush.msra.mxu0 %v1144
    %1172 = vmatpush.msra.mxu0 %v1143
    %1173 = vmatpush.msra.mxu0 %v1142
    %1174 = vmatpush.msra.mxu0 %v1141
    %1175 = vmatpush.msra.mxu0 %v1140
    %1176 = vmatpush.msra.mxu0 %v1139
    %1177 = vmatpush.msra.mxu0 %v1138
    %1178 = vmatmul.f32.gmra.mxu0 %v1151
    %v1179 = vpop.f32.mrf.mxu0
    %v1180 = vadd.f32 %v1120, %v1179
    %1181 = vmatmul.f32.gmra.mxu0 %v1154
    %v1182 = vpop.f32.mrf.mxu0
    %v1183 = vadd.f32 %v1121, %v1182
    %1184 = vmatmul.f32.gmra.mxu0 %v1157
    %v1185 = vpop.f32.mrf.mxu0
    %v1186 = vadd.f32 %v1122, %v1185
    %1187 = vmatmul.f32.gmra.mxu0 %v1160
    %v1188 = vpop.f32.mrf.mxu0
    %v1189 = vadd.f32 %v1123, %v1188
    %1190 = vdwg.mxu0
    %1191 = vxpose.xlu0.b32.start [1/16] %v76, 128
    %1192 = vxpose.xlu0.b32.cont [2/16] %v77, 128
    %1193 = vxpose.xlu0.b32.cont [3/16] %v78, 128
    %1194 = vxpose.xlu0.b32.cont [4/16] %v79, 128
    %1195 = vxpose.xlu0.b32.cont [5/16] 0.0, 128
    %1196 = vxpose.xlu0.b32.cont [6/16] 0.0, 128
    %1197 = vxpose.xlu0.b32.cont [7/16] 0.0, 128
    %1198 = vxpose.xlu0.b32.cont [8/16] 0.0, 128
    %1199 = vxpose.xlu0.b32.cont [9/16] 0.0, 128
    %1200 = vxpose.xlu0.b32.cont [10/16] 0.0, 128
    %1201 = vxpose.xlu0.b32.cont [11/16] 0.0, 128
    %1202 = vxpose.xlu0.b32.cont [12/16] 0.0, 128
    %1203 = vxpose.xlu0.b32.cont [13/16] 0.0, 128
    %1204 = vxpose.xlu0.b32.cont [14/16] 0.0, 128
    %1205 = vxpose.xlu0.b32.cont [15/16] 0.0, 128
    %1206 = vxpose.xlu0.b32.end [16/16] 0.0, 128
    %v1207 = vpop.trf.xlu0
    %v1208 = vpop.trf.xlu0
    %v1209 = vpop.trf.xlu0
    %v1210 = vpop.trf.xlu0
    %v1211 = vpop.trf.xlu0
    %v1212 = vpop.trf.xlu0
    %v1213 = vpop.trf.xlu0
    %v1214 = vpop.trf.xlu0
    %v1215 = vpop.trf.xlu0
    %v1216 = vpop.trf.xlu0
    %v1217 = vpop.trf.xlu0
    %v1218 = vpop.trf.xlu0
    %v1219 = vpop.trf.xlu0
    %v1220 = vpop.trf.xlu0
    %v1221 = vpop.trf.xlu0
    %v1222 = vpop.trf.xlu0
    %v1224 = vsel %vm1124, %v1207, 0
    %1226 = vmatpush.msra.mxu0 0.0
    %1227 = vmatpush.msra.mxu0 0.0
    %1228 = vmatpush.msra.mxu0 0.0
    %1229 = vmatpush.msra.mxu0 0.0
    %1230 = vmatpush.msra.mxu0 0.0
    %1231 = vmatpush.msra.mxu0 0.0
    %1232 = vmatpush.msra.mxu0 0.0
    %1233 = vmatpush.msra.mxu0 0.0
    %1234 = vmatpush.msra.mxu0 0.0
    %1235 = vmatpush.msra.mxu0 0.0
    %1236 = vmatpush.msra.mxu0 0.0
    %1237 = vmatpush.msra.mxu0 0.0
    %1238 = vmatpush.msra.mxu0 %v1189
    %1239 = vmatpush.msra.mxu0 %v1186
    %1240 = vmatpush.msra.mxu0 %v1183
    %1241 = vmatpush.msra.mxu0 %v1180
    %1242 = vmatmul.f32.gmra.mxu0 %v1224
    %v1243 = vpop.f32.mrf.mxu0
    %v1244 = vadd.f32 0.0, %v1243
    %1245 = vdwg.mxu0
    %v1246 = vmul.f32 %v1244, 0.33333334
    %v1247 = vadd.f32 %v1246, %v45
    %1248 = vst.msk [vmem:[#allocation2] sm:$0xff] %vm195, %v1247
    // Predicated region
    $region54: #{tpu_custom_call.1} parent=1 // pred_check
      _
    $region55: #{tpu_custom_call.1} parent=1 // pred_check_branch
      %1250 = sbr.rel (0) target = $region57
    $region56: #{tpu_custom_call.1} parent=1 // pred_region
      %1252 = vsyncadd [#allocation3], 0
      %s1254 = sshll.u32 [#allocation2], 4
      %s1255 = int_to_ptr.vmem [resolvable:$true] %s1254
      %s1256 = sshll.u32 %s13, 4
      %s1257 = int_to_ptr.hbm [resolvable:$true] %s1256
      %1259 = dma.vmem_to_hbm [thread:$0]  %s1255, 128, %s1257, [#allocation3]
    $region57: #{tpu_custom_call.1} parent=1 // pred_fallthru
      _
    // Predicated region
    $region58: #{tpu_custom_call.1} parent=1 // pred_check
      _
    $region59: #{tpu_custom_call.1} parent=1 // pred_check_branch
      %1261 = sbr.rel (0) target = $region61
    $region60: #{tpu_custom_call.1} parent=1 // pred_region
      %1263 = dma.done [#allocation3], 128
    $region61: #{tpu_custom_call.1} parent=1 // pred_fallthru
      _
    %1264 = vsyncpa [#allocation3], 1

</llo_original>
